<compile_context>
chip_gen: v7x
topology: tpu7x:2x2x1
jax: 0.10.0
libtpu: 0.0.40
codegen_flags: <defaults>
</compile_context>

<pallas_src>
import jax
import jax.numpy as jnp
from jax.experimental import pallas as pl
from jax.experimental.pallas import tpu as pltpu

HIDDEN = 512


def _round_up(x, m):
    return (x + m - 1) // m * m


# --------------------------------------------------------------------------- #
# Kernel body: one batch tile, 4 bf16 matmuls (f32 acc) + bias + ReLU, fused.  #
# --------------------------------------------------------------------------- #
def _mlp_kernel(x_ref, w1_ref, b1_ref, w2_ref, b2_ref, w3_ref, b3_ref,
                w4_ref, b4_ref, o_ref):
    x = x_ref[...].astype(jnp.bfloat16)  # no-op if x already streamed as bf16

    # TODO(synk): for very large n_features (F*512*2B approaching the VMEM cap,
    # ~F>20-40k on v7x) add a K-tiled 'arbitrary' grid axis / emit_pipeline for
    # layer 1 so w1 need not be fully resident; w2/w3/w4 stay resident.
    h = jnp.dot(x, w1_ref[...], preferred_element_type=jnp.float32) + b1_ref[...]
    h = jnp.maximum(h, 0.0).astype(jnp.bfloat16)

    h = jnp.dot(h, w2_ref[...], preferred_element_type=jnp.float32) + b2_ref[...]
    h = jnp.maximum(h, 0.0).astype(jnp.bfloat16)

    h = jnp.dot(h, w3_ref[...], preferred_element_type=jnp.float32) + b3_ref[...]
    h = jnp.maximum(h, 0.0).astype(jnp.bfloat16)

    out = jnp.dot(h, w4_ref[...], preferred_element_type=jnp.float32) + b4_ref[...]
    o_ref[...] = out.astype(o_ref.dtype)


# --------------------------------------------------------------------------- #
# Helpers                                                                      #
# --------------------------------------------------------------------------- #
def _const_spec(shape):
    """Grid-invariant operand (weights/biases): single-buffer to halve its VMEM.

    Returns (spec, single_buffered) so the VMEM budget can account for the
    older-JAX fallback (which double-buffers).
    """
    try:
        return pl.BlockSpec(shape, lambda i: (0, 0),
                            pipeline_mode=pl.Buffered(1)), True
    except (TypeError, AttributeError):  # older jax without pipeline_mode/Buffered
        return pl.BlockSpec(shape, lambda i: (0, 0)), False


def _vmem_cap_bytes():
    """~85% of this chip's physical per-core VMEM (v7x: 64 MiB, others: 128 MiB)."""
    phys = 128 * 1024 * 1024
    try:
        info = pltpu.get_tpu_info()
        phys = int(getattr(info, "vmem_capacity_bytes", phys))
    except Exception:
        pass
    return max(24 * 1024 * 1024, int(phys * 0.85))


def _vmem_budget_bytes(batch_tile, n_features, c_pad, x_itemsize, out_itemsize,
                       weights_single_buffered):
    """Explicit scoped-VMEM budget for resident bf16 weights + pipelined tiles."""
    wbuf = 1 if weights_single_buffered else 2
    wt = wbuf * 2 * (n_features * HIDDEN + 2 * HIDDEN * HIDDEN + HIDDEN * c_pad)
    bias = wbuf * 4 * (3 * HIDDEN + c_pad)
    x_tile = 2 * batch_tile * n_features * x_itemsize   # double-buffered input
    o_tile = 2 * batch_tile * c_pad * out_itemsize      # double-buffered output
    acts = 6 * batch_tile * HIDDEN * 4                  # in-flight activations
    est = int(1.4 * (wt + bias + x_tile + o_tile + acts))
    return min(_vmem_cap_bytes(), max(32 * 1024 * 1024, est))


def _choose_batch_tile(B):
    """Tile from {512,256,128} (+ exact small tile): minimize padding, prefer
    >=2 grid steps (v7x: both TensorCores busy), then the largest tile."""
    b16 = _round_up(B, 16)
    if b16 <= 128:
        return b16  # tiny batch: a single 16-row-aligned tile
    candidates = [512, 256, 128]
    if b16 < 256:
        candidates.append(b16)  # near-exact single tile for smallish batches
    best_key, best_tile = None, None
    for t in candidates:
        b_pad = _round_up(B, t)
        steps = b_pad // t
        key = (b_pad - B, 0 if steps >= 2 else 1, -t)
        if best_key is None or key < best_key:
            best_key, best_tile = key, t
    return best_tile


# --------------------------------------------------------------------------- #
# One-time parameter preparation (hoisted out of the per-call wrapper)         #
# --------------------------------------------------------------------------- #
def prepare_large_mlp_v2_params(params):
    """Cast weights to bf16 and zero-pad the class dim to 128 lanes, once.

    params: (w1, b1, w2, b2, w3, b3, w4, b4) with W as [in_dim, out_dim] and
    biases as [1, out_dim] (f32).  Returns (prepped_params, n_classes).
    """
    w1, b1, w2, b2, w3, b3, w4, b4 = params
    C = w4.shape[1]
    C_pad = _round_up(C, 128)
    if C_pad != C:
        w4 = jnp.pad(w4, ((0, 0), (0, C_pad - C)))
        b4 = jnp.pad(b4, ((0, 0), (0, C_pad - C)))
    prepped = (
        w1.astype(jnp.bfloat16), b1.astype(jnp.float32),
        w2.astype(jnp.bfloat16), b2.astype(jnp.float32),
        w3.astype(jnp.bfloat16), b3.astype(jnp.float32),
        w4.astype(jnp.bfloat16), b4.astype(jnp.float32),
    )
    return prepped, C


# --------------------------------------------------------------------------- #
# Forward wrapper                                                              #
# --------------------------------------------------------------------------- #
def large_mlp_v2_forward(x, prepped_params, n_classes, *, batch_tile=None,
                         out_dtype=jnp.float32):
    """Fused MLP forward. x: [B, n_features] (f32 or bf16) -> [B, n_classes]."""
    w1b, b1, w2b, b2, w3b, b3, w4b, b4 = prepped_params
    B, F = x.shape
    C = n_classes
    C_pad = w4b.shape[1]

    if batch_tile is None:
        batch_tile = _choose_batch_tile(B)
    assert batch_tile % 16 == 0, "batch_tile must be a multiple of 16"
    B_pad = _round_up(B, batch_tile)
    grid = (B_pad // batch_tile,)

    x_p = x if B_pad == B else jnp.pad(x, ((0, B_pad - B), (0, 0)))

    const_specs = []
    single_buffered = True
    for arr in (w1b, b1, w2b, b2, w3b, b3, w4b, b4):
        spec, sb = _const_spec(arr.shape)
        const_specs.append(spec)
        single_buffered = single_buffered and sb

    out_itemsize = jnp.dtype(out_dtype).itemsize
    x_itemsize = jnp.dtype(x.dtype).itemsize
    weight_bytes = (2 * (F * HIDDEN + 2 * HIDDEN * HIDDEN + HIDDEN * C_pad)
                    + 4 * (3 * HIDDEN + C_pad))
    cost = pl.CostEstimate(
        flops=2 * B_pad * HIDDEN * (F + 2 * HIDDEN + C_pad),
        transcendentals=0,
        bytes_accessed=B_pad * F * x_itemsize + weight_bytes
                       + B_pad * C_pad * out_itemsize,
    )

    out = pl.pallas_call(
        _mlp_kernel,
        out_shape=jax.ShapeDtypeStruct((B_pad, C_pad), out_dtype),
        grid_spec=pltpu.PrefetchScalarGridSpec(
            num_scalar_prefetch=0,
            grid=grid,
            in_specs=[pl.BlockSpec((batch_tile, F), lambda i: (i, 0))]  # x tile
                     + const_specs,
            out_specs=pl.BlockSpec((batch_tile, C_pad), lambda i: (i, 0)),
        ),
        compiler_params=pltpu.CompilerParams(
            dimension_semantics=("parallel",),
            vmem_limit_bytes=_vmem_budget_bytes(
                batch_tile, F, C_pad, x_itemsize, out_itemsize,
                single_buffered)),
        cost_estimate=cost,
    )(x_p, w1b, b1, w2b, b2, w3b, b3, w4b, b4)

    return out[:B, :C]


# --------------------------------------------------------------------------- #
# Init + pure-JAX reference (for the self-test)                                #
# --------------------------------------------------------------------------- #
def init_params(key, n_features, n_classes):
    """nn.Linear-style init (U[-1/sqrt(fan_in), 1/sqrt(fan_in)]); W as [in, out]."""
    dims = [(n_features, HIDDEN), (HIDDEN, HIDDEN), (HIDDEN, HIDDEN),
            (HIDDEN, n_classes)]
    params = []
    for fan_in, fan_out in dims:
        key, kw, kb = jax.random.split(key, 3)
        bound = 1.0 / (fan_in ** 0.5)
        w = jax.random.uniform(kw, (fan_in, fan_out), jnp.float32,
                               minval=-bound, maxval=bound)
        b = jax.random.uniform(kb, (1, fan_out), jnp.float32,
                               minval=-bound, maxval=bound)
        params.extend([w, b])
    return tuple(params)


def _reference_forward(x, params, matmul_dtype=jnp.float32):
    """Pure-JAX reference of LargeMLPv2.forward (optionally bf16 matmul inputs)."""
    w1, b1, w2, b2, w3, b3, w4, b4 = params
    dot = lambda a, w: jnp.dot(a.astype(matmul_dtype), w.astype(matmul_dtype),
                               preferred_element_type=jnp.float32)
    h = jax.nn.relu(dot(x, w1) + b1)
    h = jax.nn.relu(dot(h, w2) + b2)
    h = jax.nn.relu(dot(h, w3) + b3)
    return dot(h, w4) + b4


if __name__ == "__main__":
    key = jax.random.PRNGKey(0)
    kx, kp = jax.random.split(key)

    batch = 8
    n_features = 64
    n_classes = 10

    x = jax.random.normal(kx, (batch, n_features), jnp.float32)
    params = init_params(kp, n_features, n_classes)

    # One-time parameter preparation (bf16 cast + class-dim padding), hoisted
    # out of the forward path.
    prepped, C = prepare_large_mlp_v2_params(params)

    out = jax.block_until_ready(large_mlp_v2_forward(x, prepped, C))
    assert out.shape == (batch, n_classes)
    assert out.dtype == jnp.float32

    # Exact-semantics reference (same bf16 matmul inputs, f32 accumulation).
    ref_bf16 = _reference_forward(x, params, matmul_dtype=jnp.bfloat16)
    assert jnp.allclose(out, ref_bf16, atol=1e-3, rtol=1e-3), "mismatch vs bf16 ref"

    # Loose sanity check vs the full-f32 PyTorch-equivalent forward.
    ref_f32 = _reference_forward(x, params, matmul_dtype=jnp.float32)
    assert jnp.allclose(out, ref_f32, atol=3e-2, rtol=3e-2), "mismatch vs f32 ref"

    # Exercise the multi-step (tiled, >=2 grid steps) path as well.
    kb2 = jax.random.fold_in(kx, 1)
    x_big = jax.random.normal(kb2, (300, n_features), jnp.float32)
    out_big = jax.block_until_ready(large_mlp_v2_forward(x_big, prepped, C))
    ref_big = _reference_forward(x_big, params, matmul_dtype=jnp.bfloat16)
    assert out_big.shape == (300, n_classes)
    assert jnp.allclose(out_big, ref_big, atol=1e-3, rtol=1e-3), "mismatch (tiled)"

    print("KERNEL_OK")
</pallas_src>

<mosaic_0001>
module attributes {stable_mosaic.version = 11 : i64} {
  func.func @_mlp_kernel(%arg0: i32, %arg1: memref<16x64xf32, #tpu.memory_space<vmem>>, %arg2: memref<64x512xbf16, #tpu.memory_space<vmem>>, %arg3: memref<1x512xf32, #tpu.memory_space<vmem>>, %arg4: memref<512x512xbf16, #tpu.memory_space<vmem>>, %arg5: memref<1x512xf32, #tpu.memory_space<vmem>>, %arg6: memref<512x512xbf16, #tpu.memory_space<vmem>>, %arg7: memref<1x512xf32, #tpu.memory_space<vmem>>, %arg8: memref<512x128xbf16, #tpu.memory_space<vmem>>, %arg9: memref<1x128xf32, #tpu.memory_space<vmem>>, %arg10: memref<16x128xf32, #tpu.memory_space<vmem>>) attributes {dimension_semantics = [#tpu.dimension_semantics<parallel>], iteration_bounds = array<i64: 1>, scalar_prefetch = 0 : i64, scratch_operands = 0 : i64, tpu.core_type = #tpu.core_type<tc>, window_params = [{transform_indices = @transform_0, window_bounds = array<i64: 16, 64>}, {pipeline_mode = #tpu.pipeline_mode<synchronous>, transform_indices = @transform_1, window_bounds = array<i64: 64, 512>}, {pipeline_mode = #tpu.pipeline_mode<synchronous>, transform_indices = @transform_2, window_bounds = array<i64: 1, 512>}, {pipeline_mode = #tpu.pipeline_mode<synchronous>, transform_indices = @transform_3, window_bounds = array<i64: 512, 512>}, {pipeline_mode = #tpu.pipeline_mode<synchronous>, transform_indices = @transform_4, window_bounds = array<i64: 1, 512>}, {pipeline_mode = #tpu.pipeline_mode<synchronous>, transform_indices = @transform_5, window_bounds = array<i64: 512, 512>}, {pipeline_mode = #tpu.pipeline_mode<synchronous>, transform_indices = @transform_6, window_bounds = array<i64: 1, 512>}, {pipeline_mode = #tpu.pipeline_mode<synchronous>, transform_indices = @transform_7, window_bounds = array<i64: 512, 128>}, {pipeline_mode = #tpu.pipeline_mode<synchronous>, transform_indices = @transform_8, window_bounds = array<i64: 1, 128>}, {transform_indices = @transform_9, window_bounds = array<i64: 16, 128>}]} {
    %c0 = arith.constant 0 : index
    %c0_0 = arith.constant 0 : index
    %0 = vector.load %arg1[%c0, %c0_0] : memref<16x64xf32, #tpu.memory_space<vmem>>, vector<16x64xf32>
    %1 = arith.truncf %0 : vector<16x64xf32> to vector<16x64xbf16>
    %c0_1 = arith.constant 0 : index
    %c0_2 = arith.constant 0 : index
    %2 = vector.load %arg2[%c0_1, %c0_2] : memref<64x512xbf16, #tpu.memory_space<vmem>>, vector<64x512xbf16>
    %cst = arith.constant dense<0.000000e+00> : vector<16x512xf32>
    %3 = tpu.matmul %1, %2, %cst {dimension_numbers = #tpu.dot_dimension_numbers<[1], [0], [0], [1], [0, 0, 1, 1], [], []>} : vector<16x64xbf16>, vector<64x512xbf16>, vector<16x512xf32> -> vector<16x512xf32>
    %c0_3 = arith.constant 0 : index
    %c0_4 = arith.constant 0 : index
    %4 = vector.load %arg3[%c0_3, %c0_4] : memref<1x512xf32, #tpu.memory_space<vmem>>, vector<1x512xf32>
    %5 = vector.broadcast %4 : vector<1x512xf32> to vector<16x512xf32>
    %6 = arith.addf %3, %5 : vector<16x512xf32>
    %cst_5 = arith.constant 0.000000e+00 : f32
    %7 = vector.broadcast %cst_5 : f32 to vector<16x512xf32>
    %8 = arith.maximumf %6, %7 : vector<16x512xf32>
    %9 = arith.truncf %8 : vector<16x512xf32> to vector<16x512xbf16>
    %c0_6 = arith.constant 0 : index
    %c0_7 = arith.constant 0 : index
    %10 = vector.load %arg4[%c0_6, %c0_7] : memref<512x512xbf16, #tpu.memory_space<vmem>>, vector<512x512xbf16>
    %cst_8 = arith.constant dense<0.000000e+00> : vector<16x512xf32>
    %11 = tpu.matmul %9, %10, %cst_8 {dimension_numbers = #tpu.dot_dimension_numbers<[1], [0], [0], [1], [0, 0, 1, 1], [], []>} : vector<16x512xbf16>, vector<512x512xbf16>, vector<16x512xf32> -> vector<16x512xf32>
    %c0_9 = arith.constant 0 : index
    %c0_10 = arith.constant 0 : index
    %12 = vector.load %arg5[%c0_9, %c0_10] : memref<1x512xf32, #tpu.memory_space<vmem>>, vector<1x512xf32>
    %13 = vector.broadcast %12 : vector<1x512xf32> to vector<16x512xf32>
    %14 = arith.addf %11, %13 : vector<16x512xf32>
    %cst_11 = arith.constant 0.000000e+00 : f32
    %15 = vector.broadcast %cst_11 : f32 to vector<16x512xf32>
    %16 = arith.maximumf %14, %15 : vector<16x512xf32>
    %17 = arith.truncf %16 : vector<16x512xf32> to vector<16x512xbf16>
    %c0_12 = arith.constant 0 : index
    %c0_13 = arith.constant 0 : index
    %18 = vector.load %arg6[%c0_12, %c0_13] : memref<512x512xbf16, #tpu.memory_space<vmem>>, vector<512x512xbf16>
    %cst_14 = arith.constant dense<0.000000e+00> : vector<16x512xf32>
    %19 = tpu.matmul %17, %18, %cst_14 {dimension_numbers = #tpu.dot_dimension_numbers<[1], [0], [0], [1], [0, 0, 1, 1], [], []>} : vector<16x512xbf16>, vector<512x512xbf16>, vector<16x512xf32> -> vector<16x512xf32>
    %c0_15 = arith.constant 0 : index
    %c0_16 = arith.constant 0 : index
    %20 = vector.load %arg7[%c0_15, %c0_16] : memref<1x512xf32, #tpu.memory_space<vmem>>, vector<1x512xf32>
    %21 = vector.broadcast %20 : vector<1x512xf32> to vector<16x512xf32>
    %22 = arith.addf %19, %21 : vector<16x512xf32>
    %cst_17 = arith.constant 0.000000e+00 : f32
    %23 = vector.broadcast %cst_17 : f32 to vector<16x512xf32>
    %24 = arith.maximumf %22, %23 : vector<16x512xf32>
    %25 = arith.truncf %24 : vector<16x512xf32> to vector<16x512xbf16>
    %c0_18 = arith.constant 0 : index
    %c0_19 = arith.constant 0 : index
    %26 = vector.load %arg8[%c0_18, %c0_19] : memref<512x128xbf16, #tpu.memory_space<vmem>>, vector<512x128xbf16>
    %cst_20 = arith.constant dense<0.000000e+00> : vector<16x128xf32>
    %27 = tpu.matmul %25, %26, %cst_20 {dimension_numbers = #tpu.dot_dimension_numbers<[1], [0], [0], [1], [0, 0, 1, 1], [], []>} : vector<16x512xbf16>, vector<512x128xbf16>, vector<16x128xf32> -> vector<16x128xf32>
    %c0_21 = arith.constant 0 : index
    %c0_22 = arith.constant 0 : index
    %28 = vector.load %arg9[%c0_21, %c0_22] : memref<1x128xf32, #tpu.memory_space<vmem>>, vector<1x128xf32>
    %29 = vector.broadcast %28 : vector<1x128xf32> to vector<16x128xf32>
    %30 = arith.addf %27, %29 : vector<16x128xf32>
    %c0_23 = arith.constant 0 : index
    %c0_24 = arith.constant 0 : index
    %31 = vector.load %arg10[%c0_23, %c0_24] : memref<16x128xf32, #tpu.memory_space<vmem>>, vector<16x128xf32>
    tpu.vector_store %arg10[%c0_23, %c0_24], %30 {strides = array<i32>} : memref<16x128xf32, #tpu.memory_space<vmem>>, vector<16x128xf32>,
    return
  }
  func.func @transform_0(%arg0: i32) -> (i32, i32) {
    %c0_i32 = arith.constant 0 : i32
    %c0_i32_0 = arith.constant 0 : i32
    return %arg0, %c0_i32 : i32, i32
  }
  func.func @transform_1(%arg0: i32) -> (i32, i32) {
    %c0_i32 = arith.constant 0 : i32
    %c0_i32_0 = arith.constant 0 : i32
    %c0_i32_1 = arith.constant 0 : i32
    return %c0_i32, %c0_i32_0 : i32, i32
  }
  func.func @transform_2(%arg0: i32) -> (i32, i32) {
    %c0_i32 = arith.constant 0 : i32
    %c0_i32_0 = arith.constant 0 : i32
    %c0_i32_1 = arith.constant 0 : i32
    return %c0_i32, %c0_i32_0 : i32, i32
  }
  func.func @transform_3(%arg0: i32) -> (i32, i32) {
    %c0_i32 = arith.constant 0 : i32
    %c0_i32_0 = arith.constant 0 : i32
    %c0_i32_1 = arith.constant 0 : i32
    return %c0_i32, %c0_i32_0 : i32, i32
  }
  func.func @transform_4(%arg0: i32) -> (i32, i32) {
    %c0_i32 = arith.constant 0 : i32
    %c0_i32_0 = arith.constant 0 : i32
    %c0_i32_1 = arith.constant 0 : i32
    return %c0_i32, %c0_i32_0 : i32, i32
  }
  func.func @transform_5(%arg0: i32) -> (i32, i32) {
    %c0_i32 = arith.constant 0 : i32
    %c0_i32_0 = arith.constant 0 : i32
    %c0_i32_1 = arith.constant 0 : i32
    return %c0_i32, %c0_i32_0 : i32, i32
  }
  func.func @transform_6(%arg0: i32) -> (i32, i32) {
    %c0_i32 = arith.constant 0 : i32
    %c0_i32_0 = arith.constant 0 : i32
    %c0_i32_1 = arith.constant 0 : i32
    return %c0_i32, %c0_i32_0 : i32, i32
  }
  func.func @transform_7(%arg0: i32) -> (i32, i32) {
    %c0_i32 = arith.constant 0 : i32
    %c0_i32_0 = arith.constant 0 : i32
    %c0_i32_1 = arith.constant 0 : i32
    return %c0_i32, %c0_i32_0 : i32, i32
  }
  func.func @transform_8(%arg0: i32) -> (i32, i32) {
    %c0_i32 = arith.constant 0 : i32
    %c0_i32_0 = arith.constant 0 : i32
    %c0_i32_1 = arith.constant 0 : i32
    return %c0_i32, %c0_i32_0 : i32, i32
  }
  func.func @transform_9(%arg0: i32) -> (i32, i32) {
    %c0_i32 = arith.constant 0 : i32
    %c0_i32_0 = arith.constant 0 : i32
    return %arg0, %c0_i32 : i32, i32
  }
}

</mosaic_0001>

<llo_original>
// kernel: tpu_custom_call.1
$region0: #{tpu_custom_call.1}
  #allocation0 [shape = 'u32[]', space=smem, size = 0x4, offset = 0x4, fixed_abs, tag = 'smem constant byte address 0x4 - core index']
  #allocation1 [shape = 'u32[144,128]{1,0:T(1,128)}', space=vmem, size = 0x12000, scoped, tag = 'internal scratch']
  %s0 = inlined_call_operand.hbm [shape: f32[16,64], index: 0, kind: input, shape index: {}]
  %s1 = inlined_call_operand.hbm [shape: bf16[64,512], index: 1, kind: input, shape index: {}]
  %s2 = inlined_call_operand.vmem [shape: f32[1,512], index: 2, kind: input, shape index: {}]
  %s3 = inlined_call_operand.hbm [shape: bf16[512,512], index: 3, kind: input, shape index: {}]
  %s4 = inlined_call_operand.vmem [shape: f32[1,512], index: 4, kind: input, shape index: {}]
  %s5 = inlined_call_operand.hbm [shape: bf16[512,512], index: 5, kind: input, shape index: {}]
  %s6 = inlined_call_operand.vmem [shape: f32[1,512], index: 6, kind: input, shape index: {}]
  %s7 = inlined_call_operand.hbm [shape: bf16[512,128], index: 7, kind: input, shape index: {}]
  %s8 = inlined_call_operand.vmem [shape: f32[1,128], index: 8, kind: input, shape index: {}]
  %s9 = inlined_call_operand.hbm [shape: f32[16,128], index: 9, kind: output, shape index: {}]
  %s10 = sld [smem:[#allocation0]]
  $region66: #{tpu_custom_call.1} parent=0
    _
  %s12 = ssub.s32 1, %s10
  %s13 = scalar_select 0, %s12, %s10
  $region1: #{tpu_custom_call.1} parent=0
    #allocation2 [shape = 'u8[8192]{0}', space=vmem, size = 0x2000, scoped, tag = 'input window, operand 0, single buffered']
    #allocation3 [shape = 's32[1]{0}', space=sflag, size = 0x4, scoped, tag = 'scoped memory for tpu_custom_call.1']
    #allocation4 [shape = 's32[1]{0}', space=sflag, size = 0x4, scoped, tag = 'scoped memory for tpu_custom_call.1']
    #allocation5 [shape = 'u8[65536]{0}', space=vmem, size = 0x10000, scoped, tag = 'input window, operand 1, single buffered']
    #allocation6 [shape = 's32[1]{0}', space=sflag, size = 0x4, scoped, tag = 'scoped memory for tpu_custom_call.1']
    #allocation7 [shape = 'u8[524288]{0}', space=vmem, size = 0x80000, scoped, tag = 'input window, operand 3, single buffered']
    #allocation8 [shape = 'u8[524288]{0}', space=vmem, size = 0x80000, scoped, tag = 'input window, operand 5, single buffered']
    #allocation9 [shape = 's32[1]{0}', space=sflag, size = 0x4, scoped, tag = 'scoped memory for tpu_custom_call.1']
    #allocation10 [shape = 'u8[131072]{0}', space=vmem, size = 0x20000, scoped, tag = 'input window, operand 7, single buffered']
    #allocation11 [shape = 'u8[8192]{0}', space=vmem, size = 0x2000, scoped, tag = 'output window, operand 0, single buffered']
    %14 = vsyncpa [#allocation3], 0
    %15 = vsyncpa [#allocation6], 0
    %16 = vsyncpa [#allocation9], 0
    %17 = vsyncpa [#allocation4], 0
    // Predicated region
    $region2: #{tpu_custom_call.1} parent=1 // pred_check
      _
    $region3: #{tpu_custom_call.1} parent=1 // pred_check_branch
      %19 = sbr.rel (0) target = $region5
    $region4: #{tpu_custom_call.1} parent=1 // pred_region
      %s21 = ssub.s32 256, 256
      %22 = vsyncadd [#allocation3], %s21
      %s23 = sshll.u32 [#allocation2], 4
      %s24 = int_to_ptr.vmem [resolvable:$true] %s23
      %29 = dma.hbm_to_vmem [thread:$0]  %s0, 256, %s24, [#allocation3], 128, 128, 8
    $region5: #{tpu_custom_call.1} parent=1 // pred_fallthru
      _
    // Predicated region
    $region6: #{tpu_custom_call.1} parent=1 // pred_check
      _
    $region7: #{tpu_custom_call.1} parent=1 // pred_check_branch
      %31 = sbr.rel (0) target = $region9
    $region8: #{tpu_custom_call.1} parent=1 // pred_region
      %s33 = ssub.s32 2048, 2048
      %34 = vsyncadd [#allocation6], %s33
      %s35 = sshll.u32 [#allocation5], 4
      %s36 = int_to_ptr.vmem [resolvable:$true] %s35
      %41 = dma.hbm_to_vmem [thread:$0]  %s1, 2048, %s36, [#allocation6], 256, 256, 16
    $region9: #{tpu_custom_call.1} parent=1 // pred_fallthru
      _
    // Predicated region
    $region10: #{tpu_custom_call.1} parent=1 // pred_check
      _
    $region11: #{tpu_custom_call.1} parent=1 // pred_check_branch
      %43 = sbr.rel (0) target = $region13
    $region12: #{tpu_custom_call.1} parent=1 // pred_region
      _
    $region13: #{tpu_custom_call.1} parent=1 // pred_fallthru
      _
    // Predicated region
    $region14: #{tpu_custom_call.1} parent=1 // pred_check
      _
    $region15: #{tpu_custom_call.1} parent=1 // pred_check_branch
      %45 = sbr.rel (0) target = $region17
    $region16: #{tpu_custom_call.1} parent=1 // pred_region
      %s47 = ssub.s32 16384, 16384
      %48 = vsyncadd [#allocation6], %s47
      %s49 = sshll.u32 [#allocation7], 4
      %s50 = int_to_ptr.vmem [resolvable:$true] %s49
      %55 = dma.hbm_to_vmem [thread:$0]  %s3, 16384, %s50, [#allocation6], 256, 256, 16
    $region17: #{tpu_custom_call.1} parent=1 // pred_fallthru
      _
    // Predicated region
    $region18: #{tpu_custom_call.1} parent=1 // pred_check
      _
    $region19: #{tpu_custom_call.1} parent=1 // pred_check_branch
      %57 = sbr.rel (0) target = $region21
    $region20: #{tpu_custom_call.1} parent=1 // pred_region
      _
    $region21: #{tpu_custom_call.1} parent=1 // pred_fallthru
      _
    // Predicated region
    $region22: #{tpu_custom_call.1} parent=1 // pred_check
      _
    $region23: #{tpu_custom_call.1} parent=1 // pred_check_branch
      %59 = sbr.rel (0) target = $region25
    $region24: #{tpu_custom_call.1} parent=1 // pred_region
      %s61 = ssub.s32 16384, 16384
      %62 = vsyncadd [#allocation9], %s61
      %s63 = sshll.u32 [#allocation8], 4
      %s64 = int_to_ptr.vmem [resolvable:$true] %s63
      %69 = dma.hbm_to_vmem [thread:$0]  %s5, 16384, %s64, [#allocation9], 256, 256, 16
    $region25: #{tpu_custom_call.1} parent=1 // pred_fallthru
      _
    // Predicated region
    $region26: #{tpu_custom_call.1} parent=1 // pred_check
      _
    $region27: #{tpu_custom_call.1} parent=1 // pred_check_branch
      %71 = sbr.rel (0) target = $region29
    $region28: #{tpu_custom_call.1} parent=1 // pred_region
      _
    $region29: #{tpu_custom_call.1} parent=1 // pred_fallthru
      _
    // Predicated region
    $region30: #{tpu_custom_call.1} parent=1 // pred_check
      _
    $region31: #{tpu_custom_call.1} parent=1 // pred_check_branch
      %73 = sbr.rel (0) target = $region33
    $region32: #{tpu_custom_call.1} parent=1 // pred_region
      %s75 = ssub.s32 4096, 4096
      %76 = vsyncadd [#allocation9], %s75
      %s77 = sshll.u32 [#allocation10], 4
      %s78 = int_to_ptr.vmem [resolvable:$true] %s77
      %83 = dma.hbm_to_vmem [thread:$0]  %s7, 4096, %s78, [#allocation9], 64, 64, 4
    $region33: #{tpu_custom_call.1} parent=1 // pred_fallthru
      _
    // Predicated region
    $region34: #{tpu_custom_call.1} parent=1 // pred_check
      _
    $region35: #{tpu_custom_call.1} parent=1 // pred_check_branch
      %85 = sbr.rel (0) target = $region37
    $region36: #{tpu_custom_call.1} parent=1 // pred_region
      _
    $region37: #{tpu_custom_call.1} parent=1 // pred_fallthru
      _
    // Predicated region
    $region38: #{tpu_custom_call.1} parent=1 // pred_check
      _
    $region39: #{tpu_custom_call.1} parent=1 // pred_check_branch
      %87 = sbr.rel (0) target = $region41
    $region40: #{tpu_custom_call.1} parent=1 // pred_region
      %88 = dma.done [#allocation3], 256
    $region41: #{tpu_custom_call.1} parent=1 // pred_fallthru
      _
    // Predicated region
    $region42: #{tpu_custom_call.1} parent=1 // pred_check
      _
    $region43: #{tpu_custom_call.1} parent=1 // pred_check_branch
      %90 = sbr.rel (0) target = $region45
    $region44: #{tpu_custom_call.1} parent=1 // pred_region
      %91 = dma.done [#allocation6], 2048
    $region45: #{tpu_custom_call.1} parent=1 // pred_fallthru
      _
    // Predicated region
    $region46: #{tpu_custom_call.1} parent=1 // pred_check
      _
    $region47: #{tpu_custom_call.1} parent=1 // pred_check_branch
      %93 = sbr.rel (0) target = $region49
    $region48: #{tpu_custom_call.1} parent=1 // pred_region
      %94 = dma.done [#allocation6], 16384
    $region49: #{tpu_custom_call.1} parent=1 // pred_fallthru
      _
    // Predicated region
    $region50: #{tpu_custom_call.1} parent=1 // pred_check
      _
    $region51: #{tpu_custom_call.1} parent=1 // pred_check_branch
      %96 = sbr.rel (0) target = $region53
    $region52: #{tpu_custom_call.1} parent=1 // pred_region
      %97 = dma.done [#allocation9], 16384
    $region53: #{tpu_custom_call.1} parent=1 // pred_fallthru
      _
    // Predicated region
    $region54: #{tpu_custom_call.1} parent=1 // pred_check
      _
    $region55: #{tpu_custom_call.1} parent=1 // pred_check_branch
      %99 = sbr.rel (0) target = $region57
    $region56: #{tpu_custom_call.1} parent=1 // pred_region
      %100 = dma.done [#allocation9], 4096
    $region57: #{tpu_custom_call.1} parent=1 // pred_fallthru
      _
    %v102 = vld [vmem:[#allocation2] sm:$0xff]
    %v103 = vld [vmem:[#allocation2 + $0x8] sm:$0xff]
    %v104 = vpack.c.bf16 %v103, %v102
    %v105 = vld [vmem:[#allocation5] sm:$0xff]
    %v106 = vld [vmem:[#allocation5 + $0x8] sm:$0xff]
    %v107 = vld [vmem:[#allocation5 + $0x10] sm:$0xff]
    %v108 = vld [vmem:[#allocation5 + $0x18] sm:$0xff]
    %v109 = vld [vmem:[#allocation5 + $0x20] sm:$0xff]
    %v110 = vld [vmem:[#allocation5 + $0x28] sm:$0xff]
    %v111 = vld [vmem:[#allocation5 + $0x30] sm:$0xff]
    %v112 = vld [vmem:[#allocation5 + $0x38] sm:$0xff]
    %v113 = vld [vmem:[#allocation5 + $0x40] sm:$0xff]
    %v114 = vld [vmem:[#allocation5 + $0x48] sm:$0xff]
    %v115 = vld [vmem:[#allocation5 + $0x50] sm:$0xff]
    %v116 = vld [vmem:[#allocation5 + $0x58] sm:$0xff]
    %v117 = vld [vmem:[#allocation5 + $0x60] sm:$0xff]
    %v118 = vld [vmem:[#allocation5 + $0x68] sm:$0xff]
    %v119 = vld [vmem:[#allocation5 + $0x70] sm:$0xff]
    %v120 = vld [vmem:[#allocation5 + $0x78] sm:$0xff]
    %v121 = vld [vmem:[%s2] sm:$0xf]
    %v123 = vlaneseq
    %v124 = vshrl.u32 %v123, 7
    %v125 = vsub.s32 0, %v124
    %v126 = vrot.slane %v121, %v125
    %v127 = vlaneseq
    %v128 = vshrl.u32 %v127, 7
    %v129 = vsub.s32 1, %v128
    %v130 = vrot.slane %v121, %v129
    %v131 = vlaneseq
    %v132 = vshrl.u32 %v131, 7
    %v133 = vsub.s32 2, %v132
    %v134 = vrot.slane %v121, %v133
    %v135 = vlaneseq
    %v136 = vshrl.u32 %v135, 7
    %v137 = vsub.s32 3, %v136
    %v138 = vrot.slane %v121, %v137
    %v159 = vunpack.c.l.b16 %v105
    %v160 = vunpack.c.h.b16 %v105
    %v161 = vunpack.c.l.b16 %v106
    %v162 = vunpack.c.h.b16 %v106
    %v163 = vunpack.c.l.b16 %v107
    %v164 = vunpack.c.h.b16 %v107
    %v165 = vunpack.c.l.b16 %v108
    %v166 = vunpack.c.h.b16 %v108
    %v167 = vunpack.c.l.b16 %v109
    %v168 = vunpack.c.h.b16 %v109
    %v169 = vunpack.c.l.b16 %v110
    %v170 = vunpack.c.h.b16 %v110
    %v171 = vunpack.c.l.b16 %v111
    %v172 = vunpack.c.h.b16 %v111
    %v173 = vunpack.c.l.b16 %v112
    %v174 = vunpack.c.h.b16 %v112
    %v175 = vunpack.c.l.b16 %v113
    %v176 = vunpack.c.h.b16 %v113
    %v177 = vunpack.c.l.b16 %v114
    %v178 = vunpack.c.h.b16 %v114
    %v179 = vunpack.c.l.b16 %v115
    %v180 = vunpack.c.h.b16 %v115
    %v181 = vunpack.c.l.b16 %v116
    %v182 = vunpack.c.h.b16 %v116
    %v183 = vunpack.c.l.b16 %v117
    %v184 = vunpack.c.h.b16 %v117
    %v185 = vunpack.c.l.b16 %v118
    %v186 = vunpack.c.h.b16 %v118
    %v187 = vunpack.c.l.b16 %v119
    %v188 = vunpack.c.h.b16 %v119
    %v189 = vunpack.c.l.b16 %v120
    %v190 = vunpack.c.h.b16 %v120
    %v191 = vpack.c.b16 %v163, %v159
    %v192 = vpack.c.b16 %v164, %v160
    %v193 = vpack.c.b16 %v165, %v161
    %v194 = vpack.c.b16 %v166, %v162
    %v195 = vpack.c.b16 %v171, %v167
    %v196 = vpack.c.b16 %v172, %v168
    %v197 = vpack.c.b16 %v173, %v169
    %v198 = vpack.c.b16 %v174, %v170
    %v199 = vpack.c.b16 %v179, %v175
    %v200 = vpack.c.b16 %v180, %v176
    %v201 = vpack.c.b16 %v181, %v177
    %v202 = vpack.c.b16 %v182, %v178
    %v203 = vpack.c.b16 %v187, %v183
    %v204 = vpack.c.b16 %v188, %v184
    %v205 = vpack.c.b16 %v189, %v185
    %v206 = vpack.c.b16 %v190, %v186
    %vm223 = vcmask 523264
    %v225 = vsel %vm223, %v104, 0
    %227 = vmatprep.subr.bf16.mxu0 %v192
    %228 = vmatpush1.bf16.msra.mxu0 %v191
    %229 = vmatprep.subr.bf16.mxu0 %v196
    %230 = vmatpush1.bf16.msra.mxu0 %v195
    %231 = vmatprep.subr.bf16.mxu0 %v200
    %232 = vmatpush1.bf16.msra.mxu0 %v199
    %233 = vmatprep.subr.bf16.mxu0 %v204
    %234 = vmatpush1.bf16.msra.mxu0 %v203
    %235 = vmatprep.subr.bf16.mxu0 0
    %236 = vmatpush1.bf16.msra.mxu0 0
    %237 = vmatprep.subr.bf16.mxu0 0
    %238 = vmatpush1.bf16.msra.mxu0 0
    %239 = vmatprep.subr.bf16.mxu0 0
    %240 = vmatpush1.bf16.msra.mxu0 0
    %241 = vmatprep.subr.bf16.mxu0 0
    %242 = vmatpush1.bf16.msra.mxu0 0
    %243 = vmatprep.subr.bf16.mxu0 0
    %244 = vmatpush1.bf16.msra.mxu0 0
    %245 = vmatprep.subr.bf16.mxu0 0
    %246 = vmatpush1.bf16.msra.mxu0 0
    %247 = vmatprep.subr.bf16.mxu0 0
    %248 = vmatpush1.bf16.msra.mxu0 0
    %249 = vmatprep.subr.bf16.mxu0 0
    %250 = vmatpush1.bf16.msra.mxu0 0
    %251 = vmatprep.subr.bf16.mxu0 0
    %252 = vmatpush1.bf16.msra.mxu0 0
    %253 = vmatprep.subr.bf16.mxu0 0
    %254 = vmatpush1.bf16.msra.mxu0 0
    %255 = vmatprep.subr.bf16.mxu0 0
    %256 = vmatpush1.bf16.msra.mxu0 0
    %257 = vmatprep.subr.bf16.mxu0 0
    %258 = vmatpush1.bf16.msra.mxu0 0
    %259 = vmatprep.mubr.bf16.mxu0 0
    %260 = vmatmul.mubr.bf16.gmra.mrb[0].mxu0 %v225
    %v261 = vpop.f32.mrb[0].mxu0
    %v262 = vadd.f32 %v126, %v261
    %v263 = vpop.f32.mrb[0].mxu0
    %v264 = vadd.f32 %v130, %v263
    %v265 = vpop.f32.mrb[0].mxu0
    %v266 = vadd.f32 %v126, %v265
    %v267 = vpop.f32.mrb[0].mxu0
    %v268 = vadd.f32 %v130, %v267
    %269 = vdwg.mxu0
    %270 = vmatprep.subr.bf16.mxu0 %v194
    %271 = vmatpush1.bf16.msra.mxu0 %v193
    %272 = vmatprep.subr.bf16.mxu0 %v198
    %273 = vmatpush1.bf16.msra.mxu0 %v197
    %274 = vmatprep.subr.bf16.mxu0 %v202
    %275 = vmatpush1.bf16.msra.mxu0 %v201
    %276 = vmatprep.subr.bf16.mxu0 %v206
    %277 = vmatpush1.bf16.msra.mxu0 %v205
    %278 = vmatprep.subr.bf16.mxu0 0
    %279 = vmatpush1.bf16.msra.mxu0 0
    %280 = vmatprep.subr.bf16.mxu0 0
    %281 = vmatpush1.bf16.msra.mxu0 0
    %282 = vmatprep.subr.bf16.mxu0 0
    %283 = vmatpush1.bf16.msra.mxu0 0
    %284 = vmatprep.subr.bf16.mxu0 0
    %285 = vmatpush1.bf16.msra.mxu0 0
    %286 = vmatprep.subr.bf16.mxu0 0
    %287 = vmatpush1.bf16.msra.mxu0 0
    %288 = vmatprep.subr.bf16.mxu0 0
    %289 = vmatpush1.bf16.msra.mxu0 0
    %290 = vmatprep.subr.bf16.mxu0 0
    %291 = vmatpush1.bf16.msra.mxu0 0
    %292 = vmatprep.subr.bf16.mxu0 0
    %293 = vmatpush1.bf16.msra.mxu0 0
    %294 = vmatprep.subr.bf16.mxu0 0
    %295 = vmatpush1.bf16.msra.mxu0 0
    %296 = vmatprep.subr.bf16.mxu0 0
    %297 = vmatpush1.bf16.msra.mxu0 0
    %298 = vmatprep.subr.bf16.mxu0 0
    %299 = vmatpush1.bf16.msra.mxu0 0
    %300 = vmatprep.subr.bf16.mxu0 0
    %301 = vmatpush1.bf16.msra.mxu0 0
    %302 = vmatprep.mubr.bf16.mxu0 0
    %303 = vmatmul.mubr.bf16.gmra.mrb[0].mxu0 %v225
    %v304 = vpop.f32.mrb[0].mxu0
    %v305 = vadd.f32 %v134, %v304
    %v306 = vpop.f32.mrb[0].mxu0
    %v307 = vadd.f32 %v138, %v306
    %v308 = vpop.f32.mrb[0].mxu0
    %v309 = vadd.f32 %v134, %v308
    %v310 = vpop.f32.mrb[0].mxu0
    %v311 = vadd.f32 %v138, %v310
    %312 = vdwg.mxu0
    %v313 = vmax.f32 %v262, 0.0
    %v314 = vmax.f32 %v264, 0.0
    %v315 = vmax.f32 %v305, 0.0
    %v316 = vmax.f32 %v307, 0.0
    %v317 = vmax.f32 %v266, 0.0
    %v318 = vmax.f32 %v268, 0.0
    %v319 = vmax.f32 %v309, 0.0
    %v320 = vmax.f32 %v311, 0.0
    %v321 = vpack.c.bf16 %v317, %v313
    %v322 = vpack.c.bf16 %v318, %v314
    %v323 = vpack.c.bf16 %v319, %v315
    %v324 = vpack.c.bf16 %v320, %v316
    %v325 = vld [vmem:[#allocation7] sm:$0xff]
    %v326 = vld [vmem:[#allocation7 + $0x8] sm:$0xff]
    %v327 = vld [vmem:[#allocation7 + $0x10] sm:$0xff]
    %v328 = vld [vmem:[#allocation7 + $0x18] sm:$0xff]
    %v329 = vld [vmem:[#allocation7 + $0x20] sm:$0xff]
    %v330 = vld [vmem:[#allocation7 + $0x28] sm:$0xff]
    %v331 = vld [vmem:[#allocation7 + $0x30] sm:$0xff]
    %v332 = vld [vmem:[#allocation7 + $0x38] sm:$0xff]
    %v333 = vld [vmem:[#allocation7 + $0x40] sm:$0xff]
    %v334 = vld [vmem:[#allocation7 + $0x48] sm:$0xff]
    %v335 = vld [vmem:[#allocation7 + $0x50] sm:$0xff]
    %v336 = vld [vmem:[#allocation7 + $0x58] sm:$0xff]
    %v337 = vld [vmem:[#allocation7 + $0x60] sm:$0xff]
    %v338 = vld [vmem:[#allocation7 + $0x68] sm:$0xff]
    %v339 = vld [vmem:[#allocation7 + $0x70] sm:$0xff]
    %v340 = vld [vmem:[#allocation7 + $0x78] sm:$0xff]
    %v341 = vld [vmem:[#allocation7 + $0x80] sm:$0xff]
    %v342 = vld [vmem:[#allocation7 + $0x88] sm:$0xff]
    %v343 = vld [vmem:[#allocation7 + $0x90] sm:$0xff]
    %v344 = vld [vmem:[#allocation7 + $0x98] sm:$0xff]
    %v345 = vld [vmem:[#allocation7 + $0xa0] sm:$0xff]
    %v346 = vld [vmem:[#allocation7 + $0xa8] sm:$0xff]
    %v347 = vld [vmem:[#allocation7 + $0xb0] sm:$0xff]
    %v348 = vld [vmem:[#allocation7 + $0xb8] sm:$0xff]
    %v349 = vld [vmem:[#allocation7 + $0xc0] sm:$0xff]
    %v350 = vld [vmem:[#allocation7 + $0xc8] sm:$0xff]
    %v351 = vld [vmem:[#allocation7 + $0xd0] sm:$0xff]
    %v352 = vld [vmem:[#allocation7 + $0xd8] sm:$0xff]
    %v353 = vld [vmem:[#allocation7 + $0xe0] sm:$0xff]
    %v354 = vld [vmem:[#allocation7 + $0xe8] sm:$0xff]
    %v355 = vld [vmem:[#allocation7 + $0xf0] sm:$0xff]
    %v356 = vld [vmem:[#allocation7 + $0xf8] sm:$0xff]
    %v357 = vld [vmem:[#allocation7 + $0x100] sm:$0xff]
    %v358 = vld [vmem:[#allocation7 + $0x108] sm:$0xff]
    %v359 = vld [vmem:[#allocation7 + $0x110] sm:$0xff]
    %v360 = vld [vmem:[#allocation7 + $0x118] sm:$0xff]
    %v361 = vld [vmem:[#allocation7 + $0x120] sm:$0xff]
    %v362 = vld [vmem:[#allocation7 + $0x128] sm:$0xff]
    %v363 = vld [vmem:[#allocation7 + $0x130] sm:$0xff]
    %v364 = vld [vmem:[#allocation7 + $0x138] sm:$0xff]
    %v365 = vld [vmem:[#allocation7 + $0x140] sm:$0xff]
    %v366 = vld [vmem:[#allocation7 + $0x148] sm:$0xff]
    %v367 = vld [vmem:[#allocation7 + $0x150] sm:$0xff]
    %v368 = vld [vmem:[#allocation7 + $0x158] sm:$0xff]
    %v369 = vld [vmem:[#allocation7 + $0x160] sm:$0xff]
    %v370 = vld [vmem:[#allocation7 + $0x168] sm:$0xff]
    %v371 = vld [vmem:[#allocation7 + $0x170] sm:$0xff]
    %v372 = vld [vmem:[#allocation7 + $0x178] sm:$0xff]
    %v373 = vld [vmem:[#allocation7 + $0x180] sm:$0xff]
    %v374 = vld [vmem:[#allocation7 + $0x188] sm:$0xff]
    %v375 = vld [vmem:[#allocation7 + $0x190] sm:$0xff]
    %v376 = vld [vmem:[#allocation7 + $0x198] sm:$0xff]
    %v377 = vld [vmem:[#allocation7 + $0x1a0] sm:$0xff]
    %v378 = vld [vmem:[#allocation7 + $0x1a8] sm:$0xff]
    %v379 = vld [vmem:[#allocation7 + $0x1b0] sm:$0xff]
    %v380 = vld [vmem:[#allocation7 + $0x1b8] sm:$0xff]
    %v381 = vld [vmem:[#allocation7 + $0x1c0] sm:$0xff]
    %v382 = vld [vmem:[#allocation7 + $0x1c8] sm:$0xff]
    %v383 = vld [vmem:[#allocation7 + $0x1d0] sm:$0xff]
    %v384 = vld [vmem:[#allocation7 + $0x1d8] sm:$0xff]
    %v385 = vld [vmem:[#allocation7 + $0x1e0] sm:$0xff]
    %v386 = vld [vmem:[#allocation7 + $0x1e8] sm:$0xff]
    %v387 = vld [vmem:[#allocation7 + $0x1f0] sm:$0xff]
    %v388 = vld [vmem:[#allocation7 + $0x1f8] sm:$0xff]
    %v389 = vld [vmem:[#allocation7 + $0x200] sm:$0xff]
    %v390 = vld [vmem:[#allocation7 + $0x208] sm:$0xff]
    %v391 = vld [vmem:[#allocation7 + $0x210] sm:$0xff]
    %v392 = vld [vmem:[#allocation7 + $0x218] sm:$0xff]
    %v393 = vld [vmem:[#allocation7 + $0x220] sm:$0xff]
    %v394 = vld [vmem:[#allocation7 + $0x228] sm:$0xff]
    %v395 = vld [vmem:[#allocation7 + $0x230] sm:$0xff]
    %v396 = vld [vmem:[#allocation7 + $0x238] sm:$0xff]
    %v397 = vld [vmem:[#allocation7 + $0x240] sm:$0xff]
    %v398 = vld [vmem:[#allocation7 + $0x248] sm:$0xff]
    %v399 = vld [vmem:[#allocation7 + $0x250] sm:$0xff]
    %v400 = vld [vmem:[#allocation7 + $0x258] sm:$0xff]
    %v401 = vld [vmem:[#allocation7 + $0x260] sm:$0xff]
    %v402 = vld [vmem:[#allocation7 + $0x268] sm:$0xff]
    %v403 = vld [vmem:[#allocation7 + $0x270] sm:$0xff]
    %v404 = vld [vmem:[#allocation7 + $0x278] sm:$0xff]
    %v405 = vld [vmem:[#allocation7 + $0x280] sm:$0xff]
    %v406 = vld [vmem:[#allocation7 + $0x288] sm:$0xff]
    %v407 = vld [vmem:[#allocation7 + $0x290] sm:$0xff]
    %v408 = vld [vmem:[#allocation7 + $0x298] sm:$0xff]
    %v409 = vld [vmem:[#allocation7 + $0x2a0] sm:$0xff]
    %v410 = vld [vmem:[#allocation7 + $0x2a8] sm:$0xff]
    %v411 = vld [vmem:[#allocation7 + $0x2b0] sm:$0xff]
    %v412 = vld [vmem:[#allocation7 + $0x2b8] sm:$0xff]
    %v413 = vld [vmem:[#allocation7 + $0x2c0] sm:$0xff]
    %v414 = vld [vmem:[#allocation7 + $0x2c8] sm:$0xff]
    %v415 = vld [vmem:[#allocation7 + $0x2d0] sm:$0xff]
    %v416 = vld [vmem:[#allocation7 + $0x2d8] sm:$0xff]
    %v417 = vld [vmem:[#allocation7 + $0x2e0] sm:$0xff]
    %v418 = vld [vmem:[#allocation7 + $0x2e8] sm:$0xff]
    %v419 = vld [vmem:[#allocation7 + $0x2f0] sm:$0xff]
    %v420 = vld [vmem:[#allocation7 + $0x2f8] sm:$0xff]
    %v421 = vld [vmem:[#allocation7 + $0x300] sm:$0xff]
    %v422 = vld [vmem:[#allocation7 + $0x308] sm:$0xff]
    %v423 = vld [vmem:[#allocation7 + $0x310] sm:$0xff]
    %v424 = vld [vmem:[#allocation7 + $0x318] sm:$0xff]
    %v425 = vld [vmem:[#allocation7 + $0x320] sm:$0xff]
    %v426 = vld [vmem:[#allocation7 + $0x328] sm:$0xff]
    %v427 = vld [vmem:[#allocation7 + $0x330] sm:$0xff]
    %v428 = vld [vmem:[#allocation7 + $0x338] sm:$0xff]
    %v429 = vld [vmem:[#allocation7 + $0x340] sm:$0xff]
    %v430 = vld [vmem:[#allocation7 + $0x348] sm:$0xff]
    %v431 = vld [vmem:[#allocation7 + $0x350] sm:$0xff]
    %v432 = vld [vmem:[#allocation7 + $0x358] sm:$0xff]
    %v433 = vld [vmem:[#allocation7 + $0x360] sm:$0xff]
    %v434 = vld [vmem:[#allocation7 + $0x368] sm:$0xff]
    %v435 = vld [vmem:[#allocation7 + $0x370] sm:$0xff]
    %v436 = vld [vmem:[#allocation7 + $0x378] sm:$0xff]
    %v437 = vld [vmem:[#allocation7 + $0x380] sm:$0xff]
    %v438 = vld [vmem:[#allocation7 + $0x388] sm:$0xff]
    %v439 = vld [vmem:[#allocation7 + $0x390] sm:$0xff]
    %v440 = vld [vmem:[#allocation7 + $0x398] sm:$0xff]
    %v441 = vld [vmem:[#allocation7 + $0x3a0] sm:$0xff]
    %v442 = vld [vmem:[#allocation7 + $0x3a8] sm:$0xff]
    %v443 = vld [vmem:[#allocation7 + $0x3b0] sm:$0xff]
    %v444 = vld [vmem:[#allocation7 + $0x3b8] sm:$0xff]
    %v445 = vld [vmem:[#allocation7 + $0x3c0] sm:$0xff]
    %v446 = vld [vmem:[#allocation7 + $0x3c8] sm:$0xff]
    %v447 = vld [vmem:[#allocation7 + $0x3d0] sm:$0xff]
    %v448 = vld [vmem:[#allocation7 + $0x3d8] sm:$0xff]
    %v449 = vld [vmem:[#allocation7 + $0x3e0] sm:$0xff]
    %v450 = vld [vmem:[#allocation7 + $0x3e8] sm:$0xff]
    %v451 = vld [vmem:[#allocation7 + $0x3f0] sm:$0xff]
    %v452 = vld [vmem:[#allocation7 + $0x3f8] sm:$0xff]
    %v453 = vld [vmem:[%s4] sm:$0xf]
    %v455 = vlaneseq
    %v456 = vshrl.u32 %v455, 7
    %v457 = vsub.s32 0, %v456
    %v458 = vrot.slane %v453, %v457
    %v459 = vlaneseq
    %v460 = vshrl.u32 %v459, 7
    %v461 = vsub.s32 1, %v460
    %v462 = vrot.slane %v453, %v461
    %v463 = vlaneseq
    %v464 = vshrl.u32 %v463, 7
    %v465 = vsub.s32 2, %v464
    %v466 = vrot.slane %v453, %v465
    %v467 = vlaneseq
    %v468 = vshrl.u32 %v467, 7
    %v469 = vsub.s32 3, %v468
    %v470 = vrot.slane %v453, %v469
    %v603 = vunpack.c.l.b16 %v325
    %v604 = vunpack.c.h.b16 %v325
    %v605 = vunpack.c.l.b16 %v326
    %v606 = vunpack.c.h.b16 %v326
    %v607 = vunpack.c.l.b16 %v327
    %v608 = vunpack.c.h.b16 %v327
    %v609 = vunpack.c.l.b16 %v328
    %v610 = vunpack.c.h.b16 %v328
    %v611 = vunpack.c.l.b16 %v329
    %v612 = vunpack.c.h.b16 %v329
    %v613 = vunpack.c.l.b16 %v330
    %v614 = vunpack.c.h.b16 %v330
    %v615 = vunpack.c.l.b16 %v331
    %v616 = vunpack.c.h.b16 %v331
    %v617 = vunpack.c.l.b16 %v332
    %v618 = vunpack.c.h.b16 %v332
    %v619 = vunpack.c.l.b16 %v333
    %v620 = vunpack.c.h.b16 %v333
    %v621 = vunpack.c.l.b16 %v334
    %v622 = vunpack.c.h.b16 %v334
    %v623 = vunpack.c.l.b16 %v335
    %v624 = vunpack.c.h.b16 %v335
    %v625 = vunpack.c.l.b16 %v336
    %v626 = vunpack.c.h.b16 %v336
    %v627 = vunpack.c.l.b16 %v337
    %v628 = vunpack.c.h.b16 %v337
    %v629 = vunpack.c.l.b16 %v338
    %v630 = vunpack.c.h.b16 %v338
    %v631 = vunpack.c.l.b16 %v339
    %v632 = vunpack.c.h.b16 %v339
    %v633 = vunpack.c.l.b16 %v340
    %v634 = vunpack.c.h.b16 %v340
    %v635 = vunpack.c.l.b16 %v341
    %v636 = vunpack.c.h.b16 %v341
    %v637 = vunpack.c.l.b16 %v342
    %v638 = vunpack.c.h.b16 %v342
    %v639 = vunpack.c.l.b16 %v343
    %v640 = vunpack.c.h.b16 %v343
    %v641 = vunpack.c.l.b16 %v344
    %v642 = vunpack.c.h.b16 %v344
    %v643 = vunpack.c.l.b16 %v345
    %v644 = vunpack.c.h.b16 %v345
    %v645 = vunpack.c.l.b16 %v346
    %v646 = vunpack.c.h.b16 %v346
    %v647 = vunpack.c.l.b16 %v347
    %v648 = vunpack.c.h.b16 %v347
    %v649 = vunpack.c.l.b16 %v348
    %v650 = vunpack.c.h.b16 %v348
    %v651 = vunpack.c.l.b16 %v349
    %v652 = vunpack.c.h.b16 %v349
    %v653 = vunpack.c.l.b16 %v350
    %v654 = vunpack.c.h.b16 %v350
    %v655 = vunpack.c.l.b16 %v351
    %v656 = vunpack.c.h.b16 %v351
    %v657 = vunpack.c.l.b16 %v352
    %v658 = vunpack.c.h.b16 %v352
    %v659 = vunpack.c.l.b16 %v353
    %v660 = vunpack.c.h.b16 %v353
    %v661 = vunpack.c.l.b16 %v354
    %v662 = vunpack.c.h.b16 %v354
    %v663 = vunpack.c.l.b16 %v355
    %v664 = vunpack.c.h.b16 %v355
    %v665 = vunpack.c.l.b16 %v356
    %v666 = vunpack.c.h.b16 %v356
    %v667 = vunpack.c.l.b16 %v357
    %v668 = vunpack.c.h.b16 %v357
    %v669 = vunpack.c.l.b16 %v358
    %v670 = vunpack.c.h.b16 %v358
    %v671 = vunpack.c.l.b16 %v359
    %v672 = vunpack.c.h.b16 %v359
    %v673 = vunpack.c.l.b16 %v360
    %v674 = vunpack.c.h.b16 %v360
    %v675 = vunpack.c.l.b16 %v361
    %v676 = vunpack.c.h.b16 %v361
    %v677 = vunpack.c.l.b16 %v362
    %v678 = vunpack.c.h.b16 %v362
    %v679 = vunpack.c.l.b16 %v363
    %v680 = vunpack.c.h.b16 %v363
    %v681 = vunpack.c.l.b16 %v364
    %v682 = vunpack.c.h.b16 %v364
    %v683 = vunpack.c.l.b16 %v365
    %v684 = vunpack.c.h.b16 %v365
    %v685 = vunpack.c.l.b16 %v366
    %v686 = vunpack.c.h.b16 %v366
    %v687 = vunpack.c.l.b16 %v367
    %v688 = vunpack.c.h.b16 %v367
    %v689 = vunpack.c.l.b16 %v368
    %v690 = vunpack.c.h.b16 %v368
    %v691 = vunpack.c.l.b16 %v369
    %v692 = vunpack.c.h.b16 %v369
    %v693 = vunpack.c.l.b16 %v370
    %v694 = vunpack.c.h.b16 %v370
    %v695 = vunpack.c.l.b16 %v371
    %v696 = vunpack.c.h.b16 %v371
    %v697 = vunpack.c.l.b16 %v372
    %v698 = vunpack.c.h.b16 %v372
    %v699 = vunpack.c.l.b16 %v373
    %v700 = vunpack.c.h.b16 %v373
    %v701 = vunpack.c.l.b16 %v374
    %v702 = vunpack.c.h.b16 %v374
    %v703 = vunpack.c.l.b16 %v375
    %v704 = vunpack.c.h.b16 %v375
    %v705 = vunpack.c.l.b16 %v376
    %v706 = vunpack.c.h.b16 %v376
    %v707 = vunpack.c.l.b16 %v377
    %v708 = vunpack.c.h.b16 %v377
    %v709 = vunpack.c.l.b16 %v378
    %v710 = vunpack.c.h.b16 %v378
    %v711 = vunpack.c.l.b16 %v379
    %v712 = vunpack.c.h.b16 %v379
    %v713 = vunpack.c.l.b16 %v380
    %v714 = vunpack.c.h.b16 %v380
    %v715 = vunpack.c.l.b16 %v381
    %v716 = vunpack.c.h.b16 %v381
    %v717 = vunpack.c.l.b16 %v382
    %v718 = vunpack.c.h.b16 %v382
    %v719 = vunpack.c.l.b16 %v383
    %v720 = vunpack.c.h.b16 %v383
    %v721 = vunpack.c.l.b16 %v384
    %v722 = vunpack.c.h.b16 %v384
    %v723 = vunpack.c.l.b16 %v385
    %v724 = vunpack.c.h.b16 %v385
    %v725 = vunpack.c.l.b16 %v386
    %v726 = vunpack.c.h.b16 %v386
    %v727 = vunpack.c.l.b16 %v387
    %v728 = vunpack.c.h.b16 %v387
    %v729 = vunpack.c.l.b16 %v388
    %v730 = vunpack.c.h.b16 %v388
    %v731 = vunpack.c.l.b16 %v389
    %v732 = vunpack.c.h.b16 %v389
    %v733 = vunpack.c.l.b16 %v390
    %v734 = vunpack.c.h.b16 %v390
    %v735 = vunpack.c.l.b16 %v391
    %v736 = vunpack.c.h.b16 %v391
    %v737 = vunpack.c.l.b16 %v392
    %v738 = vunpack.c.h.b16 %v392
    %v739 = vunpack.c.l.b16 %v393
    %v740 = vunpack.c.h.b16 %v393
    %v741 = vunpack.c.l.b16 %v394
    %v742 = vunpack.c.h.b16 %v394
    %v743 = vunpack.c.l.b16 %v395
    %v744 = vunpack.c.h.b16 %v395
    %v745 = vunpack.c.l.b16 %v396
    %v746 = vunpack.c.h.b16 %v396
    %v747 = vunpack.c.l.b16 %v397
    %v748 = vunpack.c.h.b16 %v397
    %v749 = vunpack.c.l.b16 %v398
    %v750 = vunpack.c.h.b16 %v398
    %v751 = vunpack.c.l.b16 %v399
    %v752 = vunpack.c.h.b16 %v399
    %v753 = vunpack.c.l.b16 %v400
    %v754 = vunpack.c.h.b16 %v400
    %v755 = vunpack.c.l.b16 %v401
    %v756 = vunpack.c.h.b16 %v401
    %v757 = vunpack.c.l.b16 %v402
    %v758 = vunpack.c.h.b16 %v402
    %v759 = vunpack.c.l.b16 %v403
    %v760 = vunpack.c.h.b16 %v403
    %v761 = vunpack.c.l.b16 %v404
    %v762 = vunpack.c.h.b16 %v404
    %v763 = vunpack.c.l.b16 %v405
    %v764 = vunpack.c.h.b16 %v405
    %v765 = vunpack.c.l.b16 %v406
    %v766 = vunpack.c.h.b16 %v406
    %v767 = vunpack.c.l.b16 %v407
    %v768 = vunpack.c.h.b16 %v407
    %v769 = vunpack.c.l.b16 %v408
    %v770 = vunpack.c.h.b16 %v408
    %v771 = vunpack.c.l.b16 %v409
    %v772 = vunpack.c.h.b16 %v409
    %v773 = vunpack.c.l.b16 %v410
    %v774 = vunpack.c.h.b16 %v410
    %v775 = vunpack.c.l.b16 %v411
    %v776 = vunpack.c.h.b16 %v411
    %v777 = vunpack.c.l.b16 %v412
    %v778 = vunpack.c.h.b16 %v412
    %v779 = vunpack.c.l.b16 %v413
    %v780 = vunpack.c.h.b16 %v413
    %v781 = vunpack.c.l.b16 %v414
    %v782 = vunpack.c.h.b16 %v414
    %v783 = vunpack.c.l.b16 %v415
    %v784 = vunpack.c.h.b16 %v415
    %v785 = vunpack.c.l.b16 %v416
    %v786 = vunpack.c.h.b16 %v416
    %v787 = vunpack.c.l.b16 %v417
    %v788 = vunpack.c.h.b16 %v417
    %v789 = vunpack.c.l.b16 %v418
    %v790 = vunpack.c.h.b16 %v418
    %v791 = vunpack.c.l.b16 %v419
    %v792 = vunpack.c.h.b16 %v419
    %v793 = vunpack.c.l.b16 %v420
    %v794 = vunpack.c.h.b16 %v420
    %v795 = vunpack.c.l.b16 %v421
    %v796 = vunpack.c.h.b16 %v421
    %v797 = vunpack.c.l.b16 %v422
    %v798 = vunpack.c.h.b16 %v422
    %v799 = vunpack.c.l.b16 %v423
    %v800 = vunpack.c.h.b16 %v423
    %v801 = vunpack.c.l.b16 %v424
    %v802 = vunpack.c.h.b16 %v424
    %v803 = vunpack.c.l.b16 %v425
    %v804 = vunpack.c.h.b16 %v425
    %v805 = vunpack.c.l.b16 %v426
    %v806 = vunpack.c.h.b16 %v426
    %v807 = vunpack.c.l.b16 %v427
    %v808 = vunpack.c.h.b16 %v427
    %v809 = vunpack.c.l.b16 %v428
    %v810 = vunpack.c.h.b16 %v428
    %v811 = vunpack.c.l.b16 %v429
    %v812 = vunpack.c.h.b16 %v429
    %v813 = vunpack.c.l.b16 %v430
    %v814 = vunpack.c.h.b16 %v430
    %v815 = vunpack.c.l.b16 %v431
    %v816 = vunpack.c.h.b16 %v431
    %v817 = vunpack.c.l.b16 %v432
    %v818 = vunpack.c.h.b16 %v432
    %v819 = vunpack.c.l.b16 %v433
    %v820 = vunpack.c.h.b16 %v433
    %v821 = vunpack.c.l.b16 %v434
    %v822 = vunpack.c.h.b16 %v434
    %v823 = vunpack.c.l.b16 %v435
    %v824 = vunpack.c.h.b16 %v435
    %v825 = vunpack.c.l.b16 %v436
    %v826 = vunpack.c.h.b16 %v436
    %v827 = vunpack.c.l.b16 %v437
    %v828 = vunpack.c.h.b16 %v437
    %v829 = vunpack.c.l.b16 %v438
    %v830 = vunpack.c.h.b16 %v438
    %v831 = vunpack.c.l.b16 %v439
    %v832 = vunpack.c.h.b16 %v439
    %v833 = vunpack.c.l.b16 %v440
    %v834 = vunpack.c.h.b16 %v440
    %v835 = vunpack.c.l.b16 %v441
    %v836 = vunpack.c.h.b16 %v441
    %v837 = vunpack.c.l.b16 %v442
    %v838 = vunpack.c.h.b16 %v442
    %v839 = vunpack.c.l.b16 %v443
    %v840 = vunpack.c.h.b16 %v443
    %v841 = vunpack.c.l.b16 %v444
    %v842 = vunpack.c.h.b16 %v444
    %v843 = vunpack.c.l.b16 %v445
    %v844 = vunpack.c.h.b16 %v445
    %v845 = vunpack.c.l.b16 %v446
    %v846 = vunpack.c.h.b16 %v446
    %v847 = vunpack.c.l.b16 %v447
    %v848 = vunpack.c.h.b16 %v447
    %v849 = vunpack.c.l.b16 %v448
    %v850 = vunpack.c.h.b16 %v448
    %v851 = vunpack.c.l.b16 %v449
    %v852 = vunpack.c.h.b16 %v449
    %v853 = vunpack.c.l.b16 %v450
    %v854 = vunpack.c.h.b16 %v450
    %v855 = vunpack.c.l.b16 %v451
    %v856 = vunpack.c.h.b16 %v451
    %v857 = vunpack.c.l.b16 %v452
    %v858 = vunpack.c.h.b16 %v452
    %v859 = vpack.c.b16 %v607, %v603
    %v860 = vpack.c.b16 %v608, %v604
    %v861 = vpack.c.b16 %v609, %v605
    %v862 = vpack.c.b16 %v610, %v606
    %v863 = vpack.c.b16 %v615, %v611
    %v864 = vpack.c.b16 %v616, %v612
    %v865 = vpack.c.b16 %v617, %v613
    %v866 = vpack.c.b16 %v618, %v614
    %v867 = vpack.c.b16 %v623, %v619
    %v868 = vpack.c.b16 %v624, %v620
    %v869 = vpack.c.b16 %v625, %v621
    %v870 = vpack.c.b16 %v626, %v622
    %v871 = vpack.c.b16 %v631, %v627
    %v872 = vpack.c.b16 %v632, %v628
    %v873 = vpack.c.b16 %v633, %v629
    %v874 = vpack.c.b16 %v634, %v630
    %v875 = vpack.c.b16 %v639, %v635
    %v876 = vpack.c.b16 %v640, %v636
    %v877 = vpack.c.b16 %v641, %v637
    %v878 = vpack.c.b16 %v642, %v638
    %v879 = vpack.c.b16 %v647, %v643
    %v880 = vpack.c.b16 %v648, %v644
    %v881 = vpack.c.b16 %v649, %v645
    %v882 = vpack.c.b16 %v650, %v646
    %v883 = vpack.c.b16 %v655, %v651
    %v884 = vpack.c.b16 %v656, %v652
    %v885 = vpack.c.b16 %v657, %v653
    %v886 = vpack.c.b16 %v658, %v654
    %v887 = vpack.c.b16 %v663, %v659
    %v888 = vpack.c.b16 %v664, %v660
    %v889 = vpack.c.b16 %v665, %v661
    %v890 = vpack.c.b16 %v666, %v662
    %v891 = vpack.c.b16 %v671, %v667
    %v892 = vpack.c.b16 %v672, %v668
    %v893 = vpack.c.b16 %v673, %v669
    %v894 = vpack.c.b16 %v674, %v670
    %v895 = vpack.c.b16 %v679, %v675
    %v896 = vpack.c.b16 %v680, %v676
    %v897 = vpack.c.b16 %v681, %v677
    %v898 = vpack.c.b16 %v682, %v678
    %v899 = vpack.c.b16 %v687, %v683
    %v900 = vpack.c.b16 %v688, %v684
    %v901 = vpack.c.b16 %v689, %v685
    %v902 = vpack.c.b16 %v690, %v686
    %v903 = vpack.c.b16 %v695, %v691
    %v904 = vpack.c.b16 %v696, %v692
    %v905 = vpack.c.b16 %v697, %v693
    %v906 = vpack.c.b16 %v698, %v694
    %v907 = vpack.c.b16 %v703, %v699
    %v908 = vpack.c.b16 %v704, %v700
    %v909 = vpack.c.b16 %v705, %v701
    %v910 = vpack.c.b16 %v706, %v702
    %v911 = vpack.c.b16 %v711, %v707
    %v912 = vpack.c.b16 %v712, %v708
    %v913 = vpack.c.b16 %v713, %v709
    %v914 = vpack.c.b16 %v714, %v710
    %v915 = vpack.c.b16 %v719, %v715
    %v916 = vpack.c.b16 %v720, %v716
    %v917 = vpack.c.b16 %v721, %v717
    %v918 = vpack.c.b16 %v722, %v718
    %v919 = vpack.c.b16 %v727, %v723
    %v920 = vpack.c.b16 %v728, %v724
    %v921 = vpack.c.b16 %v729, %v725
    %v922 = vpack.c.b16 %v730, %v726
    %v923 = vpack.c.b16 %v735, %v731
    %v924 = vpack.c.b16 %v736, %v732
    %v925 = vpack.c.b16 %v737, %v733
    %v926 = vpack.c.b16 %v738, %v734
    %v927 = vpack.c.b16 %v743, %v739
    %v928 = vpack.c.b16 %v744, %v740
    %v929 = vpack.c.b16 %v745, %v741
    %v930 = vpack.c.b16 %v746, %v742
    %v931 = vpack.c.b16 %v751, %v747
    %v932 = vpack.c.b16 %v752, %v748
    %v933 = vpack.c.b16 %v753, %v749
    %v934 = vpack.c.b16 %v754, %v750
    %v935 = vpack.c.b16 %v759, %v755
    %v936 = vpack.c.b16 %v760, %v756
    %v937 = vpack.c.b16 %v761, %v757
    %v938 = vpack.c.b16 %v762, %v758
    %v939 = vpack.c.b16 %v767, %v763
    %v940 = vpack.c.b16 %v768, %v764
    %v941 = vpack.c.b16 %v769, %v765
    %v942 = vpack.c.b16 %v770, %v766
    %v943 = vpack.c.b16 %v775, %v771
    %v944 = vpack.c.b16 %v776, %v772
    %v945 = vpack.c.b16 %v777, %v773
    %v946 = vpack.c.b16 %v778, %v774
    %v947 = vpack.c.b16 %v783, %v779
    %v948 = vpack.c.b16 %v784, %v780
    %v949 = vpack.c.b16 %v785, %v781
    %v950 = vpack.c.b16 %v786, %v782
    %v951 = vpack.c.b16 %v791, %v787
    %v952 = vpack.c.b16 %v792, %v788
    %v953 = vpack.c.b16 %v793, %v789
    %v954 = vpack.c.b16 %v794, %v790
    %v955 = vpack.c.b16 %v799, %v795
    %v956 = vpack.c.b16 %v800, %v796
    %v957 = vpack.c.b16 %v801, %v797
    %v958 = vpack.c.b16 %v802, %v798
    %v959 = vpack.c.b16 %v807, %v803
    %v960 = vpack.c.b16 %v808, %v804
    %v961 = vpack.c.b16 %v809, %v805
    %v962 = vpack.c.b16 %v810, %v806
    %v963 = vpack.c.b16 %v815, %v811
    %v964 = vpack.c.b16 %v816, %v812
    %v965 = vpack.c.b16 %v817, %v813
    %v966 = vpack.c.b16 %v818, %v814
    %v967 = vpack.c.b16 %v823, %v819
    %v968 = vpack.c.b16 %v824, %v820
    %v969 = vpack.c.b16 %v825, %v821
    %v970 = vpack.c.b16 %v826, %v822
    %v971 = vpack.c.b16 %v831, %v827
    %v972 = vpack.c.b16 %v832, %v828
    %v973 = vpack.c.b16 %v833, %v829
    %v974 = vpack.c.b16 %v834, %v830
    %v975 = vpack.c.b16 %v839, %v835
    %v976 = vpack.c.b16 %v840, %v836
    %v977 = vpack.c.b16 %v841, %v837
    %v978 = vpack.c.b16 %v842, %v838
    %v979 = vpack.c.b16 %v847, %v843
    %v980 = vpack.c.b16 %v848, %v844
    %v981 = vpack.c.b16 %v849, %v845
    %v982 = vpack.c.b16 %v850, %v846
    %v983 = vpack.c.b16 %v855, %v851
    %v984 = vpack.c.b16 %v856, %v852
    %v985 = vpack.c.b16 %v857, %v853
    %v986 = vpack.c.b16 %v858, %v854
    %1115 = vmatprep.subr.bf16.mxu0 %v860
    %1116 = vmatpush1.bf16.msra.mxu0 %v859
    %1117 = vmatprep.subr.bf16.mxu0 %v864
    %1118 = vmatpush1.bf16.msra.mxu0 %v863
    %1119 = vmatprep.subr.bf16.mxu0 %v868
    %1120 = vmatpush1.bf16.msra.mxu0 %v867
    %1121 = vmatprep.subr.bf16.mxu0 %v872
    %1122 = vmatpush1.bf16.msra.mxu0 %v871
    %1123 = vmatprep.subr.bf16.mxu0 %v876
    %1124 = vmatpush1.bf16.msra.mxu0 %v875
    %1125 = vmatprep.subr.bf16.mxu0 %v880
    %1126 = vmatpush1.bf16.msra.mxu0 %v879
    %1127 = vmatprep.subr.bf16.mxu0 %v884
    %1128 = vmatpush1.bf16.msra.mxu0 %v883
    %1129 = vmatprep.subr.bf16.mxu0 %v888
    %1130 = vmatpush1.bf16.msra.mxu0 %v887
    %1131 = vmatprep.subr.bf16.mxu0 %v892
    %1132 = vmatpush1.bf16.msra.mxu0 %v891
    %1133 = vmatprep.subr.bf16.mxu0 %v896
    %1134 = vmatpush1.bf16.msra.mxu0 %v895
    %1135 = vmatprep.subr.bf16.mxu0 %v900
    %1136 = vmatpush1.bf16.msra.mxu0 %v899
    %1137 = vmatprep.subr.bf16.mxu0 %v904
    %1138 = vmatpush1.bf16.msra.mxu0 %v903
    %1139 = vmatprep.subr.bf16.mxu0 %v908
    %1140 = vmatpush1.bf16.msra.mxu0 %v907
    %1141 = vmatprep.subr.bf16.mxu0 %v912
    %1142 = vmatpush1.bf16.msra.mxu0 %v911
    %1143 = vmatprep.subr.bf16.mxu0 %v916
    %1144 = vmatpush1.bf16.msra.mxu0 %v915
    %1145 = vmatprep.subr.bf16.mxu0 %v920
    %1146 = vmatpush1.bf16.msra.mxu0 %v919
    %1147 = vmatprep.mubr.bf16.mxu0 %v322
    %1148 = vmatmul.mubr.bf16.gmra.mrb[0].mxu0 %v321
    %v1149 = vpop.f32.mrb[0].mxu0
    %v1150 = vadd.f32 %v458, %v1149
    %v1151 = vpop.f32.mrb[0].mxu0
    %v1152 = vadd.f32 %v462, %v1151
    %v1153 = vpop.f32.mrb[0].mxu0
    %v1154 = vadd.f32 %v458, %v1153
    %v1155 = vpop.f32.mrb[0].mxu0
    %v1156 = vadd.f32 %v462, %v1155
    %1157 = vdwg.mxu0
    %1158 = vmatprep.subr.bf16.mxu0 %v924
    %1159 = vmatpush1.bf16.msra.mxu0 %v923
    %1160 = vmatprep.subr.bf16.mxu0 %v928
    %1161 = vmatpush1.bf16.msra.mxu0 %v927
    %1162 = vmatprep.subr.bf16.mxu0 %v932
    %1163 = vmatpush1.bf16.msra.mxu0 %v931
    %1164 = vmatprep.subr.bf16.mxu0 %v936
    %1165 = vmatpush1.bf16.msra.mxu0 %v935
    %1166 = vmatprep.subr.bf16.mxu0 %v940
    %1167 = vmatpush1.bf16.msra.mxu0 %v939
    %1168 = vmatprep.subr.bf16.mxu0 %v944
    %1169 = vmatpush1.bf16.msra.mxu0 %v943
    %1170 = vmatprep.subr.bf16.mxu0 %v948
    %1171 = vmatpush1.bf16.msra.mxu0 %v947
    %1172 = vmatprep.subr.bf16.mxu0 %v952
    %1173 = vmatpush1.bf16.msra.mxu0 %v951
    %1174 = vmatprep.subr.bf16.mxu0 %v956
    %1175 = vmatpush1.bf16.msra.mxu0 %v955
    %1176 = vmatprep.subr.bf16.mxu0 %v960
    %1177 = vmatpush1.bf16.msra.mxu0 %v959
    %1178 = vmatprep.subr.bf16.mxu0 %v964
    %1179 = vmatpush1.bf16.msra.mxu0 %v963
    %1180 = vmatprep.subr.bf16.mxu0 %v968
    %1181 = vmatpush1.bf16.msra.mxu0 %v967
    %1182 = vmatprep.subr.bf16.mxu0 %v972
    %1183 = vmatpush1.bf16.msra.mxu0 %v971
    %1184 = vmatprep.subr.bf16.mxu0 %v976
    %1185 = vmatpush1.bf16.msra.mxu0 %v975
    %1186 = vmatprep.subr.bf16.mxu0 %v980
    %1187 = vmatpush1.bf16.msra.mxu0 %v979
    %1188 = vmatprep.subr.bf16.mxu0 %v984
    %1189 = vmatpush1.bf16.msra.mxu0 %v983
    %1190 = vmatprep.mubr.bf16.mxu0 %v324
    %1191 = vmatmul.mubr.bf16.gmra.mrb[0].mxu0 %v323
    %v1192 = vpop.f32.mrb[0].mxu0
    %v1193 = vadd.f32 %v1150, %v1192
    %v1194 = vpop.f32.mrb[0].mxu0
    %v1195 = vadd.f32 %v1152, %v1194
    %v1196 = vpop.f32.mrb[0].mxu0
    %v1197 = vadd.f32 %v1154, %v1196
    %v1198 = vpop.f32.mrb[0].mxu0
    %v1199 = vadd.f32 %v1156, %v1198
    %1200 = vdwg.mxu0
    %1201 = vmatprep.subr.bf16.mxu0 %v862
    %1202 = vmatpush1.bf16.msra.mxu0 %v861
    %1203 = vmatprep.subr.bf16.mxu0 %v866
    %1204 = vmatpush1.bf16.msra.mxu0 %v865
    %1205 = vmatprep.subr.bf16.mxu0 %v870
    %1206 = vmatpush1.bf16.msra.mxu0 %v869
    %1207 = vmatprep.subr.bf16.mxu0 %v874
    %1208 = vmatpush1.bf16.msra.mxu0 %v873
    %1209 = vmatprep.subr.bf16.mxu0 %v878
    %1210 = vmatpush1.bf16.msra.mxu0 %v877
    %1211 = vmatprep.subr.bf16.mxu0 %v882
    %1212 = vmatpush1.bf16.msra.mxu0 %v881
    %1213 = vmatprep.subr.bf16.mxu0 %v886
    %1214 = vmatpush1.bf16.msra.mxu0 %v885
    %1215 = vmatprep.subr.bf16.mxu0 %v890
    %1216 = vmatpush1.bf16.msra.mxu0 %v889
    %1217 = vmatprep.subr.bf16.mxu0 %v894
    %1218 = vmatpush1.bf16.msra.mxu0 %v893
    %1219 = vmatprep.subr.bf16.mxu0 %v898
    %1220 = vmatpush1.bf16.msra.mxu0 %v897
    %1221 = vmatprep.subr.bf16.mxu0 %v902
    %1222 = vmatpush1.bf16.msra.mxu0 %v901
    %1223 = vmatprep.subr.bf16.mxu0 %v906
    %1224 = vmatpush1.bf16.msra.mxu0 %v905
    %1225 = vmatprep.subr.bf16.mxu0 %v910
    %1226 = vmatpush1.bf16.msra.mxu0 %v909
    %1227 = vmatprep.subr.bf16.mxu0 %v914
    %1228 = vmatpush1.bf16.msra.mxu0 %v913
    %1229 = vmatprep.subr.bf16.mxu0 %v918
    %1230 = vmatpush1.bf16.msra.mxu0 %v917
    %1231 = vmatprep.subr.bf16.mxu0 %v922
    %1232 = vmatpush1.bf16.msra.mxu0 %v921
    %1233 = vmatprep.mubr.bf16.mxu0 %v322
    %1234 = vmatmul.mubr.bf16.gmra.mrb[0].mxu0 %v321
    %v1235 = vpop.f32.mrb[0].mxu0
    %v1236 = vadd.f32 %v466, %v1235
    %v1237 = vpop.f32.mrb[0].mxu0
    %v1238 = vadd.f32 %v470, %v1237
    %v1239 = vpop.f32.mrb[0].mxu0
    %v1240 = vadd.f32 %v466, %v1239
    %v1241 = vpop.f32.mrb[0].mxu0
    %v1242 = vadd.f32 %v470, %v1241
    %1243 = vdwg.mxu0
    %1244 = vmatprep.subr.bf16.mxu0 %v926
    %1245 = vmatpush1.bf16.msra.mxu0 %v925
    %1246 = vmatprep.subr.bf16.mxu0 %v930
    %1247 = vmatpush1.bf16.msra.mxu0 %v929
    %1248 = vmatprep.subr.bf16.mxu0 %v934
    %1249 = vmatpush1.bf16.msra.mxu0 %v933
    %1250 = vmatprep.subr.bf16.mxu0 %v938
    %1251 = vmatpush1.bf16.msra.mxu0 %v937
    %1252 = vmatprep.subr.bf16.mxu0 %v942
    %1253 = vmatpush1.bf16.msra.mxu0 %v941
    %1254 = vmatprep.subr.bf16.mxu0 %v946
    %1255 = vmatpush1.bf16.msra.mxu0 %v945
    %1256 = vmatprep.subr.bf16.mxu0 %v950
    %1257 = vmatpush1.bf16.msra.mxu0 %v949
    %1258 = vmatprep.subr.bf16.mxu0 %v954
    %1259 = vmatpush1.bf16.msra.mxu0 %v953
    %1260 = vmatprep.subr.bf16.mxu0 %v958
    %1261 = vmatpush1.bf16.msra.mxu0 %v957
    %1262 = vmatprep.subr.bf16.mxu0 %v962
    %1263 = vmatpush1.bf16.msra.mxu0 %v961
    %1264 = vmatprep.subr.bf16.mxu0 %v966
    %1265 = vmatpush1.bf16.msra.mxu0 %v965
    %1266 = vmatprep.subr.bf16.mxu0 %v970
    %1267 = vmatpush1.bf16.msra.mxu0 %v969
    %1268 = vmatprep.subr.bf16.mxu0 %v974
    %1269 = vmatpush1.bf16.msra.mxu0 %v973
    %1270 = vmatprep.subr.bf16.mxu0 %v978
    %1271 = vmatpush1.bf16.msra.mxu0 %v977
    %1272 = vmatprep.subr.bf16.mxu0 %v982
    %1273 = vmatpush1.bf16.msra.mxu0 %v981
    %1274 = vmatprep.subr.bf16.mxu0 %v986
    %1275 = vmatpush1.bf16.msra.mxu0 %v985
    %1276 = vmatprep.mubr.bf16.mxu0 %v324
    %1277 = vmatmul.mubr.bf16.gmra.mrb[0].mxu0 %v323
    %v1278 = vpop.f32.mrb[0].mxu0
    %v1279 = vadd.f32 %v1236, %v1278
    %v1280 = vpop.f32.mrb[0].mxu0
    %v1281 = vadd.f32 %v1238, %v1280
    %v1282 = vpop.f32.mrb[0].mxu0
    %v1283 = vadd.f32 %v1240, %v1282
    %v1284 = vpop.f32.mrb[0].mxu0
    %v1285 = vadd.f32 %v1242, %v1284
    %1286 = vdwg.mxu0
    %v1287 = vmax.f32 %v1193, 0.0
    %v1288 = vmax.f32 %v1195, 0.0
    %v1289 = vmax.f32 %v1279, 0.0
    %v1290 = vmax.f32 %v1281, 0.0
    %v1291 = vmax.f32 %v1197, 0.0
    %v1292 = vmax.f32 %v1199, 0.0
    %v1293 = vmax.f32 %v1283, 0.0
    %v1294 = vmax.f32 %v1285, 0.0
    %v1295 = vpack.c.bf16 %v1291, %v1287
    %v1296 = vpack.c.bf16 %v1292, %v1288
    %v1297 = vpack.c.bf16 %v1293, %v1289
    %v1298 = vpack.c.bf16 %v1294, %v1290
    %v1299 = vld [vmem:[#allocation8] sm:$0xff]
    %v1300 = vld [vmem:[#allocation8 + $0x8] sm:$0xff]
    %v1301 = vld [vmem:[#allocation8 + $0x10] sm:$0xff]
    %v1302 = vld [vmem:[#allocation8 + $0x18] sm:$0xff]
    %v1303 = vld [vmem:[#allocation8 + $0x20] sm:$0xff]
    %v1304 = vld [vmem:[#allocation8 + $0x28] sm:$0xff]
    %v1305 = vld [vmem:[#allocation8 + $0x30] sm:$0xff]
    %v1306 = vld [vmem:[#allocation8 + $0x38] sm:$0xff]
    %v1307 = vld [vmem:[#allocation8 + $0x40] sm:$0xff]
    %v1308 = vld [vmem:[#allocation8 + $0x48] sm:$0xff]
    %v1309 = vld [vmem:[#allocation8 + $0x50] sm:$0xff]
    %v1310 = vld [vmem:[#allocation8 + $0x58] sm:$0xff]
    %v1311 = vld [vmem:[#allocation8 + $0x60] sm:$0xff]
    %v1312 = vld [vmem:[#allocation8 + $0x68] sm:$0xff]
    %v1313 = vld [vmem:[#allocation8 + $0x70] sm:$0xff]
    %v1314 = vld [vmem:[#allocation8 + $0x78] sm:$0xff]
    %v1315 = vld [vmem:[#allocation8 + $0x80] sm:$0xff]
    %v1316 = vld [vmem:[#allocation8 + $0x88] sm:$0xff]
    %v1317 = vld [vmem:[#allocation8 + $0x90] sm:$0xff]
    %v1318 = vld [vmem:[#allocation8 + $0x98] sm:$0xff]
    %v1319 = vld [vmem:[#allocation8 + $0xa0] sm:$0xff]
    %v1320 = vld [vmem:[#allocation8 + $0xa8] sm:$0xff]
    %v1321 = vld [vmem:[#allocation8 + $0xb0] sm:$0xff]
    %v1322 = vld [vmem:[#allocation8 + $0xb8] sm:$0xff]
    %v1323 = vld [vmem:[#allocation8 + $0xc0] sm:$0xff]
    %v1324 = vld [vmem:[#allocation8 + $0xc8] sm:$0xff]
    %v1325 = vld [vmem:[#allocation8 + $0xd0] sm:$0xff]
    %v1326 = vld [vmem:[#allocation8 + $0xd8] sm:$0xff]
    %v1327 = vld [vmem:[#allocation8 + $0xe0] sm:$0xff]
    %v1328 = vld [vmem:[#allocation8 + $0xe8] sm:$0xff]
    %v1329 = vld [vmem:[#allocation8 + $0xf0] sm:$0xff]
    %v1330 = vld [vmem:[#allocation8 + $0xf8] sm:$0xff]
    %v1331 = vld [vmem:[#allocation8 + $0x100] sm:$0xff]
    %v1332 = vld [vmem:[#allocation8 + $0x108] sm:$0xff]
    %v1333 = vld [vmem:[#allocation8 + $0x110] sm:$0xff]
    %v1334 = vld [vmem:[#allocation8 + $0x118] sm:$0xff]
    %v1335 = vld [vmem:[#allocation8 + $0x120] sm:$0xff]
    %v1336 = vld [vmem:[#allocation8 + $0x128] sm:$0xff]
    %v1337 = vld [vmem:[#allocation8 + $0x130] sm:$0xff]
    %v1338 = vld [vmem:[#allocation8 + $0x138] sm:$0xff]
    %v1339 = vld [vmem:[#allocation8 + $0x140] sm:$0xff]
    %v1340 = vld [vmem:[#allocation8 + $0x148] sm:$0xff]
    %v1341 = vld [vmem:[#allocation8 + $0x150] sm:$0xff]
    %v1342 = vld [vmem:[#allocation8 + $0x158] sm:$0xff]
    %v1343 = vld [vmem:[#allocation8 + $0x160] sm:$0xff]
    %v1344 = vld [vmem:[#allocation8 + $0x168] sm:$0xff]
    %v1345 = vld [vmem:[#allocation8 + $0x170] sm:$0xff]
    %v1346 = vld [vmem:[#allocation8 + $0x178] sm:$0xff]
    %v1347 = vld [vmem:[#allocation8 + $0x180] sm:$0xff]
    %v1348 = vld [vmem:[#allocation8 + $0x188] sm:$0xff]
    %v1349 = vld [vmem:[#allocation8 + $0x190] sm:$0xff]
    %v1350 = vld [vmem:[#allocation8 + $0x198] sm:$0xff]
    %v1351 = vld [vmem:[#allocation8 + $0x1a0] sm:$0xff]
    %v1352 = vld [vmem:[#allocation8 + $0x1a8] sm:$0xff]
    %v1353 = vld [vmem:[#allocation8 + $0x1b0] sm:$0xff]
    %v1354 = vld [vmem:[#allocation8 + $0x1b8] sm:$0xff]
    %v1355 = vld [vmem:[#allocation8 + $0x1c0] sm:$0xff]
    %v1356 = vld [vmem:[#allocation8 + $0x1c8] sm:$0xff]
    %v1357 = vld [vmem:[#allocation8 + $0x1d0] sm:$0xff]
    %v1358 = vld [vmem:[#allocation8 + $0x1d8] sm:$0xff]
    %v1359 = vld [vmem:[#allocation8 + $0x1e0] sm:$0xff]
    %v1360 = vld [vmem:[#allocation8 + $0x1e8] sm:$0xff]
    %v1361 = vld [vmem:[#allocation8 + $0x1f0] sm:$0xff]
    %v1362 = vld [vmem:[#allocation8 + $0x1f8] sm:$0xff]
    %v1363 = vld [vmem:[#allocation8 + $0x200] sm:$0xff]
    %v1364 = vld [vmem:[#allocation8 + $0x208] sm:$0xff]
    %v1365 = vld [vmem:[#allocation8 + $0x210] sm:$0xff]
    %v1366 = vld [vmem:[#allocation8 + $0x218] sm:$0xff]
    %v1367 = vld [vmem:[#allocation8 + $0x220] sm:$0xff]
    %v1368 = vld [vmem:[#allocation8 + $0x228] sm:$0xff]
    %v1369 = vld [vmem:[#allocation8 + $0x230] sm:$0xff]
    %v1370 = vld [vmem:[#allocation8 + $0x238] sm:$0xff]
    %v1371 = vld [vmem:[#allocation8 + $0x240] sm:$0xff]
    %v1372 = vld [vmem:[#allocation8 + $0x248] sm:$0xff]
    %v1373 = vld [vmem:[#allocation8 + $0x250] sm:$0xff]
    %v1374 = vld [vmem:[#allocation8 + $0x258] sm:$0xff]
    %v1375 = vld [vmem:[#allocation8 + $0x260] sm:$0xff]
    %v1376 = vld [vmem:[#allocation8 + $0x268] sm:$0xff]
    %v1377 = vld [vmem:[#allocation8 + $0x270] sm:$0xff]
    %v1378 = vld [vmem:[#allocation8 + $0x278] sm:$0xff]
    %v1379 = vld [vmem:[#allocation8 + $0x280] sm:$0xff]
    %v1380 = vld [vmem:[#allocation8 + $0x288] sm:$0xff]
    %v1381 = vld [vmem:[#allocation8 + $0x290] sm:$0xff]
    %v1382 = vld [vmem:[#allocation8 + $0x298] sm:$0xff]
    %v1383 = vld [vmem:[#allocation8 + $0x2a0] sm:$0xff]
    %v1384 = vld [vmem:[#allocation8 + $0x2a8] sm:$0xff]
    %v1385 = vld [vmem:[#allocation8 + $0x2b0] sm:$0xff]
    %v1386 = vld [vmem:[#allocation8 + $0x2b8] sm:$0xff]
    %v1387 = vld [vmem:[#allocation8 + $0x2c0] sm:$0xff]
    %v1388 = vld [vmem:[#allocation8 + $0x2c8] sm:$0xff]
    %v1389 = vld [vmem:[#allocation8 + $0x2d0] sm:$0xff]
    %v1390 = vld [vmem:[#allocation8 + $0x2d8] sm:$0xff]
    %v1391 = vld [vmem:[#allocation8 + $0x2e0] sm:$0xff]
    %v1392 = vld [vmem:[#allocation8 + $0x2e8] sm:$0xff]
    %v1393 = vld [vmem:[#allocation8 + $0x2f0] sm:$0xff]
    %v1394 = vld [vmem:[#allocation8 + $0x2f8] sm:$0xff]
    %v1395 = vld [vmem:[#allocation8 + $0x300] sm:$0xff]
    %v1396 = vld [vmem:[#allocation8 + $0x308] sm:$0xff]
    %v1397 = vld [vmem:[#allocation8 + $0x310] sm:$0xff]
    %v1398 = vld [vmem:[#allocation8 + $0x318] sm:$0xff]
    %v1399 = vld [vmem:[#allocation8 + $0x320] sm:$0xff]
    %v1400 = vld [vmem:[#allocation8 + $0x328] sm:$0xff]
    %v1401 = vld [vmem:[#allocation8 + $0x330] sm:$0xff]
    %v1402 = vld [vmem:[#allocation8 + $0x338] sm:$0xff]
    %v1403 = vld [vmem:[#allocation8 + $0x340] sm:$0xff]
    %v1404 = vld [vmem:[#allocation8 + $0x348] sm:$0xff]
    %v1405 = vld [vmem:[#allocation8 + $0x350] sm:$0xff]
    %v1406 = vld [vmem:[#allocation8 + $0x358] sm:$0xff]
    %v1407 = vld [vmem:[#allocation8 + $0x360] sm:$0xff]
    %v1408 = vld [vmem:[#allocation8 + $0x368] sm:$0xff]
    %v1409 = vld [vmem:[#allocation8 + $0x370] sm:$0xff]
    %v1410 = vld [vmem:[#allocation8 + $0x378] sm:$0xff]
    %v1411 = vld [vmem:[#allocation8 + $0x380] sm:$0xff]
    %v1412 = vld [vmem:[#allocation8 + $0x388] sm:$0xff]
    %v1413 = vld [vmem:[#allocation8 + $0x390] sm:$0xff]
    %v1414 = vld [vmem:[#allocation8 + $0x398] sm:$0xff]
    %v1415 = vld [vmem:[#allocation8 + $0x3a0] sm:$0xff]
    %v1416 = vld [vmem:[#allocation8 + $0x3a8] sm:$0xff]
    %v1417 = vld [vmem:[#allocation8 + $0x3b0] sm:$0xff]
    %v1418 = vld [vmem:[#allocation8 + $0x3b8] sm:$0xff]
    %v1419 = vld [vmem:[#allocation8 + $0x3c0] sm:$0xff]
    %v1420 = vld [vmem:[#allocation8 + $0x3c8] sm:$0xff]
    %v1421 = vld [vmem:[#allocation8 + $0x3d0] sm:$0xff]
    %v1422 = vld [vmem:[#allocation8 + $0x3d8] sm:$0xff]
    %v1423 = vld [vmem:[#allocation8 + $0x3e0] sm:$0xff]
    %v1424 = vld [vmem:[#allocation8 + $0x3e8] sm:$0xff]
    %v1425 = vld [vmem:[#allocation8 + $0x3f0] sm:$0xff]
    %v1426 = vld [vmem:[#allocation8 + $0x3f8] sm:$0xff]
    %v1427 = vld [vmem:[%s6] sm:$0xf]
    %v1429 = vlaneseq
    %v1430 = vshrl.u32 %v1429, 7
    %v1431 = vsub.s32 0, %v1430
    %v1432 = vrot.slane %v1427, %v1431
    %v1433 = vlaneseq
    %v1434 = vshrl.u32 %v1433, 7
    %v1435 = vsub.s32 1, %v1434
    %v1436 = vrot.slane %v1427, %v1435
    %v1437 = vlaneseq
    %v1438 = vshrl.u32 %v1437, 7
    %v1439 = vsub.s32 2, %v1438
    %v1440 = vrot.slane %v1427, %v1439
    %v1441 = vlaneseq
    %v1442 = vshrl.u32 %v1441, 7
    %v1443 = vsub.s32 3, %v1442
    %v1444 = vrot.slane %v1427, %v1443
    %v1577 = vunpack.c.l.b16 %v1299
    %v1578 = vunpack.c.h.b16 %v1299
    %v1579 = vunpack.c.l.b16 %v1300
    %v1580 = vunpack.c.h.b16 %v1300
    %v1581 = vunpack.c.l.b16 %v1301
    %v1582 = vunpack.c.h.b16 %v1301
    %v1583 = vunpack.c.l.b16 %v1302
    %v1584 = vunpack.c.h.b16 %v1302
    %v1585 = vunpack.c.l.b16 %v1303
    %v1586 = vunpack.c.h.b16 %v1303
    %v1587 = vunpack.c.l.b16 %v1304
    %v1588 = vunpack.c.h.b16 %v1304
    %v1589 = vunpack.c.l.b16 %v1305
    %v1590 = vunpack.c.h.b16 %v1305
    %v1591 = vunpack.c.l.b16 %v1306
    %v1592 = vunpack.c.h.b16 %v1306
    %v1593 = vunpack.c.l.b16 %v1307
    %v1594 = vunpack.c.h.b16 %v1307
    %v1595 = vunpack.c.l.b16 %v1308
    %v1596 = vunpack.c.h.b16 %v1308
    %v1597 = vunpack.c.l.b16 %v1309
    %v1598 = vunpack.c.h.b16 %v1309
    %v1599 = vunpack.c.l.b16 %v1310
    %v1600 = vunpack.c.h.b16 %v1310
    %v1601 = vunpack.c.l.b16 %v1311
    %v1602 = vunpack.c.h.b16 %v1311
    %v1603 = vunpack.c.l.b16 %v1312
    %v1604 = vunpack.c.h.b16 %v1312
    %v1605 = vunpack.c.l.b16 %v1313
    %v1606 = vunpack.c.h.b16 %v1313
    %v1607 = vunpack.c.l.b16 %v1314
    %v1608 = vunpack.c.h.b16 %v1314
    %v1609 = vunpack.c.l.b16 %v1315
    %v1610 = vunpack.c.h.b16 %v1315
    %v1611 = vunpack.c.l.b16 %v1316
    %v1612 = vunpack.c.h.b16 %v1316
    %v1613 = vunpack.c.l.b16 %v1317
    %v1614 = vunpack.c.h.b16 %v1317
    %v1615 = vunpack.c.l.b16 %v1318
    %v1616 = vunpack.c.h.b16 %v1318
    %v1617 = vunpack.c.l.b16 %v1319
    %v1618 = vunpack.c.h.b16 %v1319
    %v1619 = vunpack.c.l.b16 %v1320
    %v1620 = vunpack.c.h.b16 %v1320
    %v1621 = vunpack.c.l.b16 %v1321
    %v1622 = vunpack.c.h.b16 %v1321
    %v1623 = vunpack.c.l.b16 %v1322
    %v1624 = vunpack.c.h.b16 %v1322
    %v1625 = vunpack.c.l.b16 %v1323
    %v1626 = vunpack.c.h.b16 %v1323
    %v1627 = vunpack.c.l.b16 %v1324
    %v1628 = vunpack.c.h.b16 %v1324
    %v1629 = vunpack.c.l.b16 %v1325
    %v1630 = vunpack.c.h.b16 %v1325
    %v1631 = vunpack.c.l.b16 %v1326
    %v1632 = vunpack.c.h.b16 %v1326
    %v1633 = vunpack.c.l.b16 %v1327
    %v1634 = vunpack.c.h.b16 %v1327
    %v1635 = vunpack.c.l.b16 %v1328
    %v1636 = vunpack.c.h.b16 %v1328
    %v1637 = vunpack.c.l.b16 %v1329
    %v1638 = vunpack.c.h.b16 %v1329
    %v1639 = vunpack.c.l.b16 %v1330
    %v1640 = vunpack.c.h.b16 %v1330
    %v1641 = vunpack.c.l.b16 %v1331
    %v1642 = vunpack.c.h.b16 %v1331
    %v1643 = vunpack.c.l.b16 %v1332
    %v1644 = vunpack.c.h.b16 %v1332
    %v1645 = vunpack.c.l.b16 %v1333
    %v1646 = vunpack.c.h.b16 %v1333
    %v1647 = vunpack.c.l.b16 %v1334
    %v1648 = vunpack.c.h.b16 %v1334
    %v1649 = vunpack.c.l.b16 %v1335
    %v1650 = vunpack.c.h.b16 %v1335
    %v1651 = vunpack.c.l.b16 %v1336
    %v1652 = vunpack.c.h.b16 %v1336
    %v1653 = vunpack.c.l.b16 %v1337
    %v1654 = vunpack.c.h.b16 %v1337
    %v1655 = vunpack.c.l.b16 %v1338
    %v1656 = vunpack.c.h.b16 %v1338
    %v1657 = vunpack.c.l.b16 %v1339
    %v1658 = vunpack.c.h.b16 %v1339
    %v1659 = vunpack.c.l.b16 %v1340
    %v1660 = vunpack.c.h.b16 %v1340
    %v1661 = vunpack.c.l.b16 %v1341
    %v1662 = vunpack.c.h.b16 %v1341
    %v1663 = vunpack.c.l.b16 %v1342
    %v1664 = vunpack.c.h.b16 %v1342
    %v1665 = vunpack.c.l.b16 %v1343
    %v1666 = vunpack.c.h.b16 %v1343
    %v1667 = vunpack.c.l.b16 %v1344
    %v1668 = vunpack.c.h.b16 %v1344
    %v1669 = vunpack.c.l.b16 %v1345
    %v1670 = vunpack.c.h.b16 %v1345
    %v1671 = vunpack.c.l.b16 %v1346
    %v1672 = vunpack.c.h.b16 %v1346
    %v1673 = vunpack.c.l.b16 %v1347
    %v1674 = vunpack.c.h.b16 %v1347
    %v1675 = vunpack.c.l.b16 %v1348
    %v1676 = vunpack.c.h.b16 %v1348
    %v1677 = vunpack.c.l.b16 %v1349
    %v1678 = vunpack.c.h.b16 %v1349
    %v1679 = vunpack.c.l.b16 %v1350
    %v1680 = vunpack.c.h.b16 %v1350
    %v1681 = vunpack.c.l.b16 %v1351
    %v1682 = vunpack.c.h.b16 %v1351
    %v1683 = vunpack.c.l.b16 %v1352
    %v1684 = vunpack.c.h.b16 %v1352
    %v1685 = vunpack.c.l.b16 %v1353
    %v1686 = vunpack.c.h.b16 %v1353
    %v1687 = vunpack.c.l.b16 %v1354
    %v1688 = vunpack.c.h.b16 %v1354
    %v1689 = vunpack.c.l.b16 %v1355
    %v1690 = vunpack.c.h.b16 %v1355
    %v1691 = vunpack.c.l.b16 %v1356
    %v1692 = vunpack.c.h.b16 %v1356
    %v1693 = vunpack.c.l.b16 %v1357
    %v1694 = vunpack.c.h.b16 %v1357
    %v1695 = vunpack.c.l.b16 %v1358
    %v1696 = vunpack.c.h.b16 %v1358
    %v1697 = vunpack.c.l.b16 %v1359
    %v1698 = vunpack.c.h.b16 %v1359
    %v1699 = vunpack.c.l.b16 %v1360
    %v1700 = vunpack.c.h.b16 %v1360
    %v1701 = vunpack.c.l.b16 %v1361
    %v1702 = vunpack.c.h.b16 %v1361
    %v1703 = vunpack.c.l.b16 %v1362
    %v1704 = vunpack.c.h.b16 %v1362
    %v1705 = vunpack.c.l.b16 %v1363
    %v1706 = vunpack.c.h.b16 %v1363
    %v1707 = vunpack.c.l.b16 %v1364
    %v1708 = vunpack.c.h.b16 %v1364
    %v1709 = vunpack.c.l.b16 %v1365
    %v1710 = vunpack.c.h.b16 %v1365
    %v1711 = vunpack.c.l.b16 %v1366
    %v1712 = vunpack.c.h.b16 %v1366
    %v1713 = vunpack.c.l.b16 %v1367
    %v1714 = vunpack.c.h.b16 %v1367
    %v1715 = vunpack.c.l.b16 %v1368
    %v1716 = vunpack.c.h.b16 %v1368
    %v1717 = vunpack.c.l.b16 %v1369
    %v1718 = vunpack.c.h.b16 %v1369
    %v1719 = vunpack.c.l.b16 %v1370
    %v1720 = vunpack.c.h.b16 %v1370
    %v1721 = vunpack.c.l.b16 %v1371
    %v1722 = vunpack.c.h.b16 %v1371
    %v1723 = vunpack.c.l.b16 %v1372
    %v1724 = vunpack.c.h.b16 %v1372
    %v1725 = vunpack.c.l.b16 %v1373
    %v1726 = vunpack.c.h.b16 %v1373
    %v1727 = vunpack.c.l.b16 %v1374
    %v1728 = vunpack.c.h.b16 %v1374
    %v1729 = vunpack.c.l.b16 %v1375
    %v1730 = vunpack.c.h.b16 %v1375
    %v1731 = vunpack.c.l.b16 %v1376
    %v1732 = vunpack.c.h.b16 %v1376
    %v1733 = vunpack.c.l.b16 %v1377
    %v1734 = vunpack.c.h.b16 %v1377
    %v1735 = vunpack.c.l.b16 %v1378
    %v1736 = vunpack.c.h.b16 %v1378
    %v1737 = vunpack.c.l.b16 %v1379
    %v1738 = vunpack.c.h.b16 %v1379
    %v1739 = vunpack.c.l.b16 %v1380
    %v1740 = vunpack.c.h.b16 %v1380
    %v1741 = vunpack.c.l.b16 %v1381
    %v1742 = vunpack.c.h.b16 %v1381
    %v1743 = vunpack.c.l.b16 %v1382
    %v1744 = vunpack.c.h.b16 %v1382
    %v1745 = vunpack.c.l.b16 %v1383
    %v1746 = vunpack.c.h.b16 %v1383
    %v1747 = vunpack.c.l.b16 %v1384
    %v1748 = vunpack.c.h.b16 %v1384
    %v1749 = vunpack.c.l.b16 %v1385
    %v1750 = vunpack.c.h.b16 %v1385
    %v1751 = vunpack.c.l.b16 %v1386
    %v1752 = vunpack.c.h.b16 %v1386
    %v1753 = vunpack.c.l.b16 %v1387
    %v1754 = vunpack.c.h.b16 %v1387
    %v1755 = vunpack.c.l.b16 %v1388
    %v1756 = vunpack.c.h.b16 %v1388
    %v1757 = vunpack.c.l.b16 %v1389
    %v1758 = vunpack.c.h.b16 %v1389
    %v1759 = vunpack.c.l.b16 %v1390
    %v1760 = vunpack.c.h.b16 %v1390
    %v1761 = vunpack.c.l.b16 %v1391
    %v1762 = vunpack.c.h.b16 %v1391
    %v1763 = vunpack.c.l.b16 %v1392
    %v1764 = vunpack.c.h.b16 %v1392
    %v1765 = vunpack.c.l.b16 %v1393
    %v1766 = vunpack.c.h.b16 %v1393
    %v1767 = vunpack.c.l.b16 %v1394
    %v1768 = vunpack.c.h.b16 %v1394
    %v1769 = vunpack.c.l.b16 %v1395
    %v1770 = vunpack.c.h.b16 %v1395
    %v1771 = vunpack.c.l.b16 %v1396
    %v1772 = vunpack.c.h.b16 %v1396
    %v1773 = vunpack.c.l.b16 %v1397
    %v1774 = vunpack.c.h.b16 %v1397
    %v1775 = vunpack.c.l.b16 %v1398
    %v1776 = vunpack.c.h.b16 %v1398
    %v1777 = vunpack.c.l.b16 %v1399
    %v1778 = vunpack.c.h.b16 %v1399
    %v1779 = vunpack.c.l.b16 %v1400
    %v1780 = vunpack.c.h.b16 %v1400
    %v1781 = vunpack.c.l.b16 %v1401
    %v1782 = vunpack.c.h.b16 %v1401
    %v1783 = vunpack.c.l.b16 %v1402
    %v1784 = vunpack.c.h.b16 %v1402
    %v1785 = vunpack.c.l.b16 %v1403
    %v1786 = vunpack.c.h.b16 %v1403
    %v1787 = vunpack.c.l.b16 %v1404
    %v1788 = vunpack.c.h.b16 %v1404
    %v1789 = vunpack.c.l.b16 %v1405
    %v1790 = vunpack.c.h.b16 %v1405
    %v1791 = vunpack.c.l.b16 %v1406
    %v1792 = vunpack.c.h.b16 %v1406
    %v1793 = vunpack.c.l.b16 %v1407
    %v1794 = vunpack.c.h.b16 %v1407
    %v1795 = vunpack.c.l.b16 %v1408
    %v1796 = vunpack.c.h.b16 %v1408
    %v1797 = vunpack.c.l.b16 %v1409
    %v1798 = vunpack.c.h.b16 %v1409
    %v1799 = vunpack.c.l.b16 %v1410
    %v1800 = vunpack.c.h.b16 %v1410
    %v1801 = vunpack.c.l.b16 %v1411
    %v1802 = vunpack.c.h.b16 %v1411
    %v1803 = vunpack.c.l.b16 %v1412
    %v1804 = vunpack.c.h.b16 %v1412
    %v1805 = vunpack.c.l.b16 %v1413
    %v1806 = vunpack.c.h.b16 %v1413
    %v1807 = vunpack.c.l.b16 %v1414
    %v1808 = vunpack.c.h.b16 %v1414
    %v1809 = vunpack.c.l.b16 %v1415
    %v1810 = vunpack.c.h.b16 %v1415
    %v1811 = vunpack.c.l.b16 %v1416
    %v1812 = vunpack.c.h.b16 %v1416
    %v1813 = vunpack.c.l.b16 %v1417
    %v1814 = vunpack.c.h.b16 %v1417
    %v1815 = vunpack.c.l.b16 %v1418
    %v1816 = vunpack.c.h.b16 %v1418
    %v1817 = vunpack.c.l.b16 %v1419
    %v1818 = vunpack.c.h.b16 %v1419
    %v1819 = vunpack.c.l.b16 %v1420
    %v1820 = vunpack.c.h.b16 %v1420
    %v1821 = vunpack.c.l.b16 %v1421
    %v1822 = vunpack.c.h.b16 %v1421
    %v1823 = vunpack.c.l.b16 %v1422
    %v1824 = vunpack.c.h.b16 %v1422
    %v1825 = vunpack.c.l.b16 %v1423
    %v1826 = vunpack.c.h.b16 %v1423
    %v1827 = vunpack.c.l.b16 %v1424
    %v1828 = vunpack.c.h.b16 %v1424
    %v1829 = vunpack.c.l.b16 %v1425
    %v1830 = vunpack.c.h.b16 %v1425
    %v1831 = vunpack.c.l.b16 %v1426
    %v1832 = vunpack.c.h.b16 %v1426
    %v1833 = vpack.c.b16 %v1581, %v1577
    %v1834 = vpack.c.b16 %v1582, %v1578
    %v1835 = vpack.c.b16 %v1583, %v1579
    %v1836 = vpack.c.b16 %v1584, %v1580
    %v1837 = vpack.c.b16 %v1589, %v1585
    %v1838 = vpack.c.b16 %v1590, %v1586
    %v1839 = vpack.c.b16 %v1591, %v1587
    %v1840 = vpack.c.b16 %v1592, %v1588
    %v1841 = vpack.c.b16 %v1597, %v1593
    %v1842 = vpack.c.b16 %v1598, %v1594
    %v1843 = vpack.c.b16 %v1599, %v1595
    %v1844 = vpack.c.b16 %v1600, %v1596
    %v1845 = vpack.c.b16 %v1605, %v1601
    %v1846 = vpack.c.b16 %v1606, %v1602
    %v1847 = vpack.c.b16 %v1607, %v1603
    %v1848 = vpack.c.b16 %v1608, %v1604
    %v1849 = vpack.c.b16 %v1613, %v1609
    %v1850 = vpack.c.b16 %v1614, %v1610
    %v1851 = vpack.c.b16 %v1615, %v1611
    %v1852 = vpack.c.b16 %v1616, %v1612
    %v1853 = vpack.c.b16 %v1621, %v1617
    %v1854 = vpack.c.b16 %v1622, %v1618
    %v1855 = vpack.c.b16 %v1623, %v1619
    %v1856 = vpack.c.b16 %v1624, %v1620
    %v1857 = vpack.c.b16 %v1629, %v1625
    %v1858 = vpack.c.b16 %v1630, %v1626
    %v1859 = vpack.c.b16 %v1631, %v1627
    %v1860 = vpack.c.b16 %v1632, %v1628
    %v1861 = vpack.c.b16 %v1637, %v1633
    %v1862 = vpack.c.b16 %v1638, %v1634
    %v1863 = vpack.c.b16 %v1639, %v1635
    %v1864 = vpack.c.b16 %v1640, %v1636
    %v1865 = vpack.c.b16 %v1645, %v1641
    %v1866 = vpack.c.b16 %v1646, %v1642
    %v1867 = vpack.c.b16 %v1647, %v1643
    %v1868 = vpack.c.b16 %v1648, %v1644
    %v1869 = vpack.c.b16 %v1653, %v1649
    %v1870 = vpack.c.b16 %v1654, %v1650
    %v1871 = vpack.c.b16 %v1655, %v1651
    %v1872 = vpack.c.b16 %v1656, %v1652
    %v1873 = vpack.c.b16 %v1661, %v1657
    %v1874 = vpack.c.b16 %v1662, %v1658
    %v1875 = vpack.c.b16 %v1663, %v1659
    %v1876 = vpack.c.b16 %v1664, %v1660
    %v1877 = vpack.c.b16 %v1669, %v1665
    %v1878 = vpack.c.b16 %v1670, %v1666
    %v1879 = vpack.c.b16 %v1671, %v1667
    %v1880 = vpack.c.b16 %v1672, %v1668
    %v1881 = vpack.c.b16 %v1677, %v1673
    %v1882 = vpack.c.b16 %v1678, %v1674
    %v1883 = vpack.c.b16 %v1679, %v1675
    %v1884 = vpack.c.b16 %v1680, %v1676
    %v1885 = vpack.c.b16 %v1685, %v1681
    %v1886 = vpack.c.b16 %v1686, %v1682
    %v1887 = vpack.c.b16 %v1687, %v1683
    %v1888 = vpack.c.b16 %v1688, %v1684
    %v1889 = vpack.c.b16 %v1693, %v1689
    %v1890 = vpack.c.b16 %v1694, %v1690
    %v1891 = vpack.c.b16 %v1695, %v1691
    %v1892 = vpack.c.b16 %v1696, %v1692
    %v1893 = vpack.c.b16 %v1701, %v1697
    %v1894 = vpack.c.b16 %v1702, %v1698
    %v1895 = vpack.c.b16 %v1703, %v1699
    %v1896 = vpack.c.b16 %v1704, %v1700
    %v1897 = vpack.c.b16 %v1709, %v1705
    %v1898 = vpack.c.b16 %v1710, %v1706
    %v1899 = vpack.c.b16 %v1711, %v1707
    %v1900 = vpack.c.b16 %v1712, %v1708
    %v1901 = vpack.c.b16 %v1717, %v1713
    %v1902 = vpack.c.b16 %v1718, %v1714
    %v1903 = vpack.c.b16 %v1719, %v1715
    %v1904 = vpack.c.b16 %v1720, %v1716
    %v1905 = vpack.c.b16 %v1725, %v1721
    %v1906 = vpack.c.b16 %v1726, %v1722
    %v1907 = vpack.c.b16 %v1727, %v1723
    %v1908 = vpack.c.b16 %v1728, %v1724
    %v1909 = vpack.c.b16 %v1733, %v1729
    %v1910 = vpack.c.b16 %v1734, %v1730
    %v1911 = vpack.c.b16 %v1735, %v1731
    %v1912 = vpack.c.b16 %v1736, %v1732
    %v1913 = vpack.c.b16 %v1741, %v1737
    %v1914 = vpack.c.b16 %v1742, %v1738
    %v1915 = vpack.c.b16 %v1743, %v1739
    %v1916 = vpack.c.b16 %v1744, %v1740
    %v1917 = vpack.c.b16 %v1749, %v1745
    %v1918 = vpack.c.b16 %v1750, %v1746
    %v1919 = vpack.c.b16 %v1751, %v1747
    %v1920 = vpack.c.b16 %v1752, %v1748
    %v1921 = vpack.c.b16 %v1757, %v1753
    %v1922 = vpack.c.b16 %v1758, %v1754
    %v1923 = vpack.c.b16 %v1759, %v1755
    %v1924 = vpack.c.b16 %v1760, %v1756
    %v1925 = vpack.c.b16 %v1765, %v1761
    %v1926 = vpack.c.b16 %v1766, %v1762
    %v1927 = vpack.c.b16 %v1767, %v1763
    %v1928 = vpack.c.b16 %v1768, %v1764
    %v1929 = vpack.c.b16 %v1773, %v1769
    %v1930 = vpack.c.b16 %v1774, %v1770
    %v1931 = vpack.c.b16 %v1775, %v1771
    %v1932 = vpack.c.b16 %v1776, %v1772
    %v1933 = vpack.c.b16 %v1781, %v1777
    %v1934 = vpack.c.b16 %v1782, %v1778
    %v1935 = vpack.c.b16 %v1783, %v1779
    %v1936 = vpack.c.b16 %v1784, %v1780
    %v1937 = vpack.c.b16 %v1789, %v1785
    %v1938 = vpack.c.b16 %v1790, %v1786
    %v1939 = vpack.c.b16 %v1791, %v1787
    %v1940 = vpack.c.b16 %v1792, %v1788
    %v1941 = vpack.c.b16 %v1797, %v1793
    %v1942 = vpack.c.b16 %v1798, %v1794
    %v1943 = vpack.c.b16 %v1799, %v1795
    %v1944 = vpack.c.b16 %v1800, %v1796
    %v1945 = vpack.c.b16 %v1805, %v1801
    %v1946 = vpack.c.b16 %v1806, %v1802
    %v1947 = vpack.c.b16 %v1807, %v1803
    %v1948 = vpack.c.b16 %v1808, %v1804
    %v1949 = vpack.c.b16 %v1813, %v1809
    %v1950 = vpack.c.b16 %v1814, %v1810
    %v1951 = vpack.c.b16 %v1815, %v1811
    %v1952 = vpack.c.b16 %v1816, %v1812
    %v1953 = vpack.c.b16 %v1821, %v1817
    %v1954 = vpack.c.b16 %v1822, %v1818
    %v1955 = vpack.c.b16 %v1823, %v1819
    %v1956 = vpack.c.b16 %v1824, %v1820
    %v1957 = vpack.c.b16 %v1829, %v1825
    %v1958 = vpack.c.b16 %v1830, %v1826
    %v1959 = vpack.c.b16 %v1831, %v1827
    %v1960 = vpack.c.b16 %v1832, %v1828
    %2089 = vmatprep.subr.bf16.mxu0 %v1834
    %2090 = vmatpush1.bf16.msra.mxu0 %v1833
    %2091 = vmatprep.subr.bf16.mxu0 %v1838
    %2092 = vmatpush1.bf16.msra.mxu0 %v1837
    %2093 = vmatprep.subr.bf16.mxu0 %v1842
    %2094 = vmatpush1.bf16.msra.mxu0 %v1841
    %2095 = vmatprep.subr.bf16.mxu0 %v1846
    %2096 = vmatpush1.bf16.msra.mxu0 %v1845
    %2097 = vmatprep.subr.bf16.mxu0 %v1850
    %2098 = vmatpush1.bf16.msra.mxu0 %v1849
    %2099 = vmatprep.subr.bf16.mxu0 %v1854
    %2100 = vmatpush1.bf16.msra.mxu0 %v1853
    %2101 = vmatprep.subr.bf16.mxu0 %v1858
    %2102 = vmatpush1.bf16.msra.mxu0 %v1857
    %2103 = vmatprep.subr.bf16.mxu0 %v1862
    %2104 = vmatpush1.bf16.msra.mxu0 %v1861
    %2105 = vmatprep.subr.bf16.mxu0 %v1866
    %2106 = vmatpush1.bf16.msra.mxu0 %v1865
    %2107 = vmatprep.subr.bf16.mxu0 %v1870
    %2108 = vmatpush1.bf16.msra.mxu0 %v1869
    %2109 = vmatprep.subr.bf16.mxu0 %v1874
    %2110 = vmatpush1.bf16.msra.mxu0 %v1873
    %2111 = vmatprep.subr.bf16.mxu0 %v1878
    %2112 = vmatpush1.bf16.msra.mxu0 %v1877
    %2113 = vmatprep.subr.bf16.mxu0 %v1882
    %2114 = vmatpush1.bf16.msra.mxu0 %v1881
    %2115 = vmatprep.subr.bf16.mxu0 %v1886
    %2116 = vmatpush1.bf16.msra.mxu0 %v1885
    %2117 = vmatprep.subr.bf16.mxu0 %v1890
    %2118 = vmatpush1.bf16.msra.mxu0 %v1889
    %2119 = vmatprep.subr.bf16.mxu0 %v1894
    %2120 = vmatpush1.bf16.msra.mxu0 %v1893
    %2121 = vmatprep.mubr.bf16.mxu0 %v1296
    %2122 = vmatmul.mubr.bf16.gmra.mrb[0].mxu0 %v1295
    %v2123 = vpop.f32.mrb[0].mxu0
    %v2124 = vadd.f32 %v1432, %v2123
    %v2125 = vpop.f32.mrb[0].mxu0
    %v2126 = vadd.f32 %v1436, %v2125
    %v2127 = vpop.f32.mrb[0].mxu0
    %v2128 = vadd.f32 %v1432, %v2127
    %v2129 = vpop.f32.mrb[0].mxu0
    %v2130 = vadd.f32 %v1436, %v2129
    %2131 = vdwg.mxu0
    %2132 = vmatprep.subr.bf16.mxu0 %v1898
    %2133 = vmatpush1.bf16.msra.mxu0 %v1897
    %2134 = vmatprep.subr.bf16.mxu0 %v1902
    %2135 = vmatpush1.bf16.msra.mxu0 %v1901
    %2136 = vmatprep.subr.bf16.mxu0 %v1906
    %2137 = vmatpush1.bf16.msra.mxu0 %v1905
    %2138 = vmatprep.subr.bf16.mxu0 %v1910
    %2139 = vmatpush1.bf16.msra.mxu0 %v1909
    %2140 = vmatprep.subr.bf16.mxu0 %v1914
    %2141 = vmatpush1.bf16.msra.mxu0 %v1913
    %2142 = vmatprep.subr.bf16.mxu0 %v1918
    %2143 = vmatpush1.bf16.msra.mxu0 %v1917
    %2144 = vmatprep.subr.bf16.mxu0 %v1922
    %2145 = vmatpush1.bf16.msra.mxu0 %v1921
    %2146 = vmatprep.subr.bf16.mxu0 %v1926
    %2147 = vmatpush1.bf16.msra.mxu0 %v1925
    %2148 = vmatprep.subr.bf16.mxu0 %v1930
    %2149 = vmatpush1.bf16.msra.mxu0 %v1929
    %2150 = vmatprep.subr.bf16.mxu0 %v1934
    %2151 = vmatpush1.bf16.msra.mxu0 %v1933
    %2152 = vmatprep.subr.bf16.mxu0 %v1938
    %2153 = vmatpush1.bf16.msra.mxu0 %v1937
    %2154 = vmatprep.subr.bf16.mxu0 %v1942
    %2155 = vmatpush1.bf16.msra.mxu0 %v1941
    %2156 = vmatprep.subr.bf16.mxu0 %v1946
    %2157 = vmatpush1.bf16.msra.mxu0 %v1945
    %2158 = vmatprep.subr.bf16.mxu0 %v1950
    %2159 = vmatpush1.bf16.msra.mxu0 %v1949
    %2160 = vmatprep.subr.bf16.mxu0 %v1954
    %2161 = vmatpush1.bf16.msra.mxu0 %v1953
    %2162 = vmatprep.subr.bf16.mxu0 %v1958
    %2163 = vmatpush1.bf16.msra.mxu0 %v1957
    %2164 = vmatprep.mubr.bf16.mxu0 %v1298
    %2165 = vmatmul.mubr.bf16.gmra.mrb[0].mxu0 %v1297
    %v2166 = vpop.f32.mrb[0].mxu0
    %v2167 = vadd.f32 %v2124, %v2166
    %v2168 = vpop.f32.mrb[0].mxu0
    %v2169 = vadd.f32 %v2126, %v2168
    %v2170 = vpop.f32.mrb[0].mxu0
    %v2171 = vadd.f32 %v2128, %v2170
    %v2172 = vpop.f32.mrb[0].mxu0
    %v2173 = vadd.f32 %v2130, %v2172
    %2174 = vdwg.mxu0
    %2175 = vmatprep.subr.bf16.mxu0 %v1836
    %2176 = vmatpush1.bf16.msra.mxu0 %v1835
    %2177 = vmatprep.subr.bf16.mxu0 %v1840
    %2178 = vmatpush1.bf16.msra.mxu0 %v1839
    %2179 = vmatprep.subr.bf16.mxu0 %v1844
    %2180 = vmatpush1.bf16.msra.mxu0 %v1843
    %2181 = vmatprep.subr.bf16.mxu0 %v1848
    %2182 = vmatpush1.bf16.msra.mxu0 %v1847
    %2183 = vmatprep.subr.bf16.mxu0 %v1852
    %2184 = vmatpush1.bf16.msra.mxu0 %v1851
    %2185 = vmatprep.subr.bf16.mxu0 %v1856
    %2186 = vmatpush1.bf16.msra.mxu0 %v1855
    %2187 = vmatprep.subr.bf16.mxu0 %v1860
    %2188 = vmatpush1.bf16.msra.mxu0 %v1859
    %2189 = vmatprep.subr.bf16.mxu0 %v1864
    %2190 = vmatpush1.bf16.msra.mxu0 %v1863
    %2191 = vmatprep.subr.bf16.mxu0 %v1868
    %2192 = vmatpush1.bf16.msra.mxu0 %v1867
    %2193 = vmatprep.subr.bf16.mxu0 %v1872
    %2194 = vmatpush1.bf16.msra.mxu0 %v1871
    %2195 = vmatprep.subr.bf16.mxu0 %v1876
    %2196 = vmatpush1.bf16.msra.mxu0 %v1875
    %2197 = vmatprep.subr.bf16.mxu0 %v1880
    %2198 = vmatpush1.bf16.msra.mxu0 %v1879
    %2199 = vmatprep.subr.bf16.mxu0 %v1884
    %2200 = vmatpush1.bf16.msra.mxu0 %v1883
    %2201 = vmatprep.subr.bf16.mxu0 %v1888
    %2202 = vmatpush1.bf16.msra.mxu0 %v1887
    %2203 = vmatprep.subr.bf16.mxu0 %v1892
    %2204 = vmatpush1.bf16.msra.mxu0 %v1891
    %2205 = vmatprep.subr.bf16.mxu0 %v1896
    %2206 = vmatpush1.bf16.msra.mxu0 %v1895
    %2207 = vmatprep.mubr.bf16.mxu0 %v1296
    %2208 = vmatmul.mubr.bf16.gmra.mrb[0].mxu0 %v1295
    %v2209 = vpop.f32.mrb[0].mxu0
    %v2210 = vadd.f32 %v1440, %v2209
    %v2211 = vpop.f32.mrb[0].mxu0
    %v2212 = vadd.f32 %v1444, %v2211
    %v2213 = vpop.f32.mrb[0].mxu0
    %v2214 = vadd.f32 %v1440, %v2213
    %v2215 = vpop.f32.mrb[0].mxu0
    %v2216 = vadd.f32 %v1444, %v2215
    %2217 = vdwg.mxu0
    %2218 = vmatprep.subr.bf16.mxu0 %v1900
    %2219 = vmatpush1.bf16.msra.mxu0 %v1899
    %2220 = vmatprep.subr.bf16.mxu0 %v1904
    %2221 = vmatpush1.bf16.msra.mxu0 %v1903
    %2222 = vmatprep.subr.bf16.mxu0 %v1908
    %2223 = vmatpush1.bf16.msra.mxu0 %v1907
    %2224 = vmatprep.subr.bf16.mxu0 %v1912
    %2225 = vmatpush1.bf16.msra.mxu0 %v1911
    %2226 = vmatprep.subr.bf16.mxu0 %v1916
    %2227 = vmatpush1.bf16.msra.mxu0 %v1915
    %2228 = vmatprep.subr.bf16.mxu0 %v1920
    %2229 = vmatpush1.bf16.msra.mxu0 %v1919
    %2230 = vmatprep.subr.bf16.mxu0 %v1924
    %2231 = vmatpush1.bf16.msra.mxu0 %v1923
    %2232 = vmatprep.subr.bf16.mxu0 %v1928
    %2233 = vmatpush1.bf16.msra.mxu0 %v1927
    %2234 = vmatprep.subr.bf16.mxu0 %v1932
    %2235 = vmatpush1.bf16.msra.mxu0 %v1931
    %2236 = vmatprep.subr.bf16.mxu0 %v1936
    %2237 = vmatpush1.bf16.msra.mxu0 %v1935
    %2238 = vmatprep.subr.bf16.mxu0 %v1940
    %2239 = vmatpush1.bf16.msra.mxu0 %v1939
    %2240 = vmatprep.subr.bf16.mxu0 %v1944
    %2241 = vmatpush1.bf16.msra.mxu0 %v1943
    %2242 = vmatprep.subr.bf16.mxu0 %v1948
    %2243 = vmatpush1.bf16.msra.mxu0 %v1947
    %2244 = vmatprep.subr.bf16.mxu0 %v1952
    %2245 = vmatpush1.bf16.msra.mxu0 %v1951
    %2246 = vmatprep.subr.bf16.mxu0 %v1956
    %2247 = vmatpush1.bf16.msra.mxu0 %v1955
    %2248 = vmatprep.subr.bf16.mxu0 %v1960
    %2249 = vmatpush1.bf16.msra.mxu0 %v1959
    %2250 = vmatprep.mubr.bf16.mxu0 %v1298
    %2251 = vmatmul.mubr.bf16.gmra.mrb[0].mxu0 %v1297
    %v2252 = vpop.f32.mrb[0].mxu0
    %v2253 = vadd.f32 %v2210, %v2252
    %v2254 = vpop.f32.mrb[0].mxu0
    %v2255 = vadd.f32 %v2212, %v2254
    %v2256 = vpop.f32.mrb[0].mxu0
    %v2257 = vadd.f32 %v2214, %v2256
    %v2258 = vpop.f32.mrb[0].mxu0
    %v2259 = vadd.f32 %v2216, %v2258
    %2260 = vdwg.mxu0
    %v2261 = vmax.f32 %v2167, 0.0
    %v2262 = vmax.f32 %v2169, 0.0
    %v2263 = vmax.f32 %v2253, 0.0
    %v2264 = vmax.f32 %v2255, 0.0
    %v2265 = vmax.f32 %v2171, 0.0
    %v2266 = vmax.f32 %v2173, 0.0
    %v2267 = vmax.f32 %v2257, 0.0
    %v2268 = vmax.f32 %v2259, 0.0
    %v2269 = vpack.c.bf16 %v2265, %v2261
    %v2270 = vpack.c.bf16 %v2266, %v2262
    %v2271 = vpack.c.bf16 %v2267, %v2263
    %v2272 = vpack.c.bf16 %v2268, %v2264
    %v2273 = vld [vmem:[#allocation10] sm:$0xf]
    %v2274 = vld [vmem:[#allocation10 + $0x4] sm:$0xf]
    %v2275 = vld [vmem:[#allocation10 + $0x8] sm:$0xf]
    %v2276 = vld [vmem:[#allocation10 + $0xc] sm:$0xf]
    %v2277 = vld [vmem:[#allocation10 + $0x10] sm:$0xf]
    %v2278 = vld [vmem:[#allocation10 + $0x14] sm:$0xf]
    %v2279 = vld [vmem:[#allocation10 + $0x18] sm:$0xf]
    %v2280 = vld [vmem:[#allocation10 + $0x1c] sm:$0xf]
    %v2281 = vld [vmem:[#allocation10 + $0x20] sm:$0xf]
    %v2282 = vld [vmem:[#allocation10 + $0x24] sm:$0xf]
    %v2283 = vld [vmem:[#allocation10 + $0x28] sm:$0xf]
    %v2284 = vld [vmem:[#allocation10 + $0x2c] sm:$0xf]
    %v2285 = vld [vmem:[#allocation10 + $0x30] sm:$0xf]
    %v2286 = vld [vmem:[#allocation10 + $0x34] sm:$0xf]
    %v2287 = vld [vmem:[#allocation10 + $0x38] sm:$0xf]
    %v2288 = vld [vmem:[#allocation10 + $0x3c] sm:$0xf]
    %v2289 = vld [vmem:[#allocation10 + $0x40] sm:$0xf]
    %v2290 = vld [vmem:[#allocation10 + $0x44] sm:$0xf]
    %v2291 = vld [vmem:[#allocation10 + $0x48] sm:$0xf]
    %v2292 = vld [vmem:[#allocation10 + $0x4c] sm:$0xf]
    %v2293 = vld [vmem:[#allocation10 + $0x50] sm:$0xf]
    %v2294 = vld [vmem:[#allocation10 + $0x54] sm:$0xf]
    %v2295 = vld [vmem:[#allocation10 + $0x58] sm:$0xf]
    %v2296 = vld [vmem:[#allocation10 + $0x5c] sm:$0xf]
    %v2297 = vld [vmem:[#allocation10 + $0x60] sm:$0xf]
    %v2298 = vld [vmem:[#allocation10 + $0x64] sm:$0xf]
    %v2299 = vld [vmem:[#allocation10 + $0x68] sm:$0xf]
    %v2300 = vld [vmem:[#allocation10 + $0x6c] sm:$0xf]
    %v2301 = vld [vmem:[#allocation10 + $0x70] sm:$0xf]
    %v2302 = vld [vmem:[#allocation10 + $0x74] sm:$0xf]
    %v2303 = vld [vmem:[#allocation10 + $0x78] sm:$0xf]
    %v2304 = vld [vmem:[#allocation10 + $0x7c] sm:$0xf]
    %v2305 = vld [vmem:[#allocation10 + $0x80] sm:$0xf]
    %v2306 = vld [vmem:[#allocation10 + $0x84] sm:$0xf]
    %v2307 = vld [vmem:[#allocation10 + $0x88] sm:$0xf]
    %v2308 = vld [vmem:[#allocation10 + $0x8c] sm:$0xf]
    %v2309 = vld [vmem:[#allocation10 + $0x90] sm:$0xf]
    %v2310 = vld [vmem:[#allocation10 + $0x94] sm:$0xf]
    %v2311 = vld [vmem:[#allocation10 + $0x98] sm:$0xf]
    %v2312 = vld [vmem:[#allocation10 + $0x9c] sm:$0xf]
    %v2313 = vld [vmem:[#allocation10 + $0xa0] sm:$0xf]
    %v2314 = vld [vmem:[#allocation10 + $0xa4] sm:$0xf]
    %v2315 = vld [vmem:[#allocation10 + $0xa8] sm:$0xf]
    %v2316 = vld [vmem:[#allocation10 + $0xac] sm:$0xf]
    %v2317 = vld [vmem:[#allocation10 + $0xb0] sm:$0xf]
    %v2318 = vld [vmem:[#allocation10 + $0xb4] sm:$0xf]
    %v2319 = vld [vmem:[#allocation10 + $0xb8] sm:$0xf]
    %v2320 = vld [vmem:[#allocation10 + $0xbc] sm:$0xf]
    %v2321 = vld [vmem:[#allocation10 + $0xc0] sm:$0xf]
    %v2322 = vld [vmem:[#allocation10 + $0xc4] sm:$0xf]
    %v2323 = vld [vmem:[#allocation10 + $0xc8] sm:$0xf]
    %v2324 = vld [vmem:[#allocation10 + $0xcc] sm:$0xf]
    %v2325 = vld [vmem:[#allocation10 + $0xd0] sm:$0xf]
    %v2326 = vld [vmem:[#allocation10 + $0xd4] sm:$0xf]
    %v2327 = vld [vmem:[#allocation10 + $0xd8] sm:$0xf]
    %v2328 = vld [vmem:[#allocation10 + $0xdc] sm:$0xf]
    %v2329 = vld [vmem:[#allocation10 + $0xe0] sm:$0xf]
    %v2330 = vld [vmem:[#allocation10 + $0xe4] sm:$0xf]
    %v2331 = vld [vmem:[#allocation10 + $0xe8] sm:$0xf]
    %v2332 = vld [vmem:[#allocation10 + $0xec] sm:$0xf]
    %v2333 = vld [vmem:[#allocation10 + $0xf0] sm:$0xf]
    %v2334 = vld [vmem:[#allocation10 + $0xf4] sm:$0xf]
    %v2335 = vld [vmem:[#allocation10 + $0xf8] sm:$0xf]
    %v2336 = vld [vmem:[#allocation10 + $0xfc] sm:$0xf]
    %v2337 = vld [vmem:[%s8] sm:$0x1]
    %v2339 = vlaneseq
    %v2340 = vshrl.u32 %v2339, 7
    %v2341 = vsub.s32 0, %v2340
    %v2342 = vrot.slane %v2337, %v2341
    %v2408 = vunpack.c.l.b16 %v2273
    %v2409 = vunpack.c.l.b16 %v2274
    %v2410 = vunpack.c.l.b16 %v2275
    %v2411 = vunpack.c.l.b16 %v2276
    %v2412 = vunpack.c.l.b16 %v2277
    %v2413 = vunpack.c.l.b16 %v2278
    %v2414 = vunpack.c.l.b16 %v2279
    %v2415 = vunpack.c.l.b16 %v2280
    %v2416 = vunpack.c.l.b16 %v2281
    %v2417 = vunpack.c.l.b16 %v2282
    %v2418 = vunpack.c.l.b16 %v2283
    %v2419 = vunpack.c.l.b16 %v2284
    %v2420 = vunpack.c.l.b16 %v2285
    %v2421 = vunpack.c.l.b16 %v2286
    %v2422 = vunpack.c.l.b16 %v2287
    %v2423 = vunpack.c.l.b16 %v2288
    %v2424 = vunpack.c.l.b16 %v2289
    %v2425 = vunpack.c.l.b16 %v2290
    %v2426 = vunpack.c.l.b16 %v2291
    %v2427 = vunpack.c.l.b16 %v2292
    %v2428 = vunpack.c.l.b16 %v2293
    %v2429 = vunpack.c.l.b16 %v2294
    %v2430 = vunpack.c.l.b16 %v2295
    %v2431 = vunpack.c.l.b16 %v2296
    %v2432 = vunpack.c.l.b16 %v2297
    %v2433 = vunpack.c.l.b16 %v2298
    %v2434 = vunpack.c.l.b16 %v2299
    %v2435 = vunpack.c.l.b16 %v2300
    %v2436 = vunpack.c.l.b16 %v2301
    %v2437 = vunpack.c.l.b16 %v2302
    %v2438 = vunpack.c.l.b16 %v2303
    %v2439 = vunpack.c.l.b16 %v2304
    %v2440 = vunpack.c.l.b16 %v2305
    %v2441 = vunpack.c.l.b16 %v2306
    %v2442 = vunpack.c.l.b16 %v2307
    %v2443 = vunpack.c.l.b16 %v2308
    %v2444 = vunpack.c.l.b16 %v2309
    %v2445 = vunpack.c.l.b16 %v2310
    %v2446 = vunpack.c.l.b16 %v2311
    %v2447 = vunpack.c.l.b16 %v2312
    %v2448 = vunpack.c.l.b16 %v2313
    %v2449 = vunpack.c.l.b16 %v2314
    %v2450 = vunpack.c.l.b16 %v2315
    %v2451 = vunpack.c.l.b16 %v2316
    %v2452 = vunpack.c.l.b16 %v2317
    %v2453 = vunpack.c.l.b16 %v2318
    %v2454 = vunpack.c.l.b16 %v2319
    %v2455 = vunpack.c.l.b16 %v2320
    %v2456 = vunpack.c.l.b16 %v2321
    %v2457 = vunpack.c.l.b16 %v2322
    %v2458 = vunpack.c.l.b16 %v2323
    %v2459 = vunpack.c.l.b16 %v2324
    %v2460 = vunpack.c.l.b16 %v2325
    %v2461 = vunpack.c.l.b16 %v2326
    %v2462 = vunpack.c.l.b16 %v2327
    %v2463 = vunpack.c.l.b16 %v2328
    %v2464 = vunpack.c.l.b16 %v2329
    %v2465 = vunpack.c.l.b16 %v2330
    %v2466 = vunpack.c.l.b16 %v2331
    %v2467 = vunpack.c.l.b16 %v2332
    %v2468 = vunpack.c.l.b16 %v2333
    %v2469 = vunpack.c.l.b16 %v2334
    %v2470 = vunpack.c.l.b16 %v2335
    %v2471 = vunpack.c.l.b16 %v2336
    %v2472 = vpack.c.b16 %v2409, %v2408
    %v2473 = vpack.c.b16 %v2411, %v2410
    %v2474 = vpack.c.b16 %v2413, %v2412
    %v2475 = vpack.c.b16 %v2415, %v2414
    %v2476 = vpack.c.b16 %v2417, %v2416
    %v2477 = vpack.c.b16 %v2419, %v2418
    %v2478 = vpack.c.b16 %v2421, %v2420
    %v2479 = vpack.c.b16 %v2423, %v2422
    %v2480 = vpack.c.b16 %v2425, %v2424
    %v2481 = vpack.c.b16 %v2427, %v2426
    %v2482 = vpack.c.b16 %v2429, %v2428
    %v2483 = vpack.c.b16 %v2431, %v2430
    %v2484 = vpack.c.b16 %v2433, %v2432
    %v2485 = vpack.c.b16 %v2435, %v2434
    %v2486 = vpack.c.b16 %v2437, %v2436
    %v2487 = vpack.c.b16 %v2439, %v2438
    %v2488 = vpack.c.b16 %v2441, %v2440
    %v2489 = vpack.c.b16 %v2443, %v2442
    %v2490 = vpack.c.b16 %v2445, %v2444
    %v2491 = vpack.c.b16 %v2447, %v2446
    %v2492 = vpack.c.b16 %v2449, %v2448
    %v2493 = vpack.c.b16 %v2451, %v2450
    %v2494 = vpack.c.b16 %v2453, %v2452
    %v2495 = vpack.c.b16 %v2455, %v2454
    %v2496 = vpack.c.b16 %v2457, %v2456
    %v2497 = vpack.c.b16 %v2459, %v2458
    %v2498 = vpack.c.b16 %v2461, %v2460
    %v2499 = vpack.c.b16 %v2463, %v2462
    %v2500 = vpack.c.b16 %v2465, %v2464
    %v2501 = vpack.c.b16 %v2467, %v2466
    %v2502 = vpack.c.b16 %v2469, %v2468
    %v2503 = vpack.c.b16 %v2471, %v2470
    %2536 = vmatprep.subr.bf16.mxu0 0
    %2537 = vmatpush1.bf16.msra.mxu0 %v2472
    %2538 = vmatprep.subr.bf16.mxu0 0
    %2539 = vmatpush1.bf16.msra.mxu0 %v2473
    %2540 = vmatprep.subr.bf16.mxu0 0
    %2541 = vmatpush1.bf16.msra.mxu0 %v2474
    %2542 = vmatprep.subr.bf16.mxu0 0
    %2543 = vmatpush1.bf16.msra.mxu0 %v2475
    %2544 = vmatprep.subr.bf16.mxu0 0
    %2545 = vmatpush1.bf16.msra.mxu0 %v2476
    %2546 = vmatprep.subr.bf16.mxu0 0
    %2547 = vmatpush1.bf16.msra.mxu0 %v2477
    %2548 = vmatprep.subr.bf16.mxu0 0
    %2549 = vmatpush1.bf16.msra.mxu0 %v2478
    %2550 = vmatprep.subr.bf16.mxu0 0
    %2551 = vmatpush1.bf16.msra.mxu0 %v2479
    %2552 = vmatprep.subr.bf16.mxu0 0
    %2553 = vmatpush1.bf16.msra.mxu0 %v2480
    %2554 = vmatprep.subr.bf16.mxu0 0
    %2555 = vmatpush1.bf16.msra.mxu0 %v2481
    %2556 = vmatprep.subr.bf16.mxu0 0
    %2557 = vmatpush1.bf16.msra.mxu0 %v2482
    %2558 = vmatprep.subr.bf16.mxu0 0
    %2559 = vmatpush1.bf16.msra.mxu0 %v2483
    %2560 = vmatprep.subr.bf16.mxu0 0
    %2561 = vmatpush1.bf16.msra.mxu0 %v2484
    %2562 = vmatprep.subr.bf16.mxu0 0
    %2563 = vmatpush1.bf16.msra.mxu0 %v2485
    %2564 = vmatprep.subr.bf16.mxu0 0
    %2565 = vmatpush1.bf16.msra.mxu0 %v2486
    %2566 = vmatprep.subr.bf16.mxu0 0
    %2567 = vmatpush1.bf16.msra.mxu0 %v2487
    %2568 = vmatprep.mubr.bf16.mxu0 %v2270
    %2569 = vmatmul.mubr.bf16.gmra.mrb[0].mxu0 %v2269
    %v2570 = vpop.f32.mrb[0].mxu0
    %v2571 = vadd.f32 %v2342, %v2570
    %v2572 = vpop.f32.mrb[0].mxu0
    %v2573 = vpop.f32.mrb[0].mxu0
    %v2574 = vadd.f32 %v2342, %v2573
    %v2575 = vpop.f32.mrb[0].mxu0
    %2576 = vdwg.mxu0
    %2577 = vmatprep.subr.bf16.mxu0 0
    %2578 = vmatpush1.bf16.msra.mxu0 %v2488
    %2579 = vmatprep.subr.bf16.mxu0 0
    %2580 = vmatpush1.bf16.msra.mxu0 %v2489
    %2581 = vmatprep.subr.bf16.mxu0 0
    %2582 = vmatpush1.bf16.msra.mxu0 %v2490
    %2583 = vmatprep.subr.bf16.mxu0 0
    %2584 = vmatpush1.bf16.msra.mxu0 %v2491
    %2585 = vmatprep.subr.bf16.mxu0 0
    %2586 = vmatpush1.bf16.msra.mxu0 %v2492
    %2587 = vmatprep.subr.bf16.mxu0 0
    %2588 = vmatpush1.bf16.msra.mxu0 %v2493
    %2589 = vmatprep.subr.bf16.mxu0 0
    %2590 = vmatpush1.bf16.msra.mxu0 %v2494
    %2591 = vmatprep.subr.bf16.mxu0 0
    %2592 = vmatpush1.bf16.msra.mxu0 %v2495
    %2593 = vmatprep.subr.bf16.mxu0 0
    %2594 = vmatpush1.bf16.msra.mxu0 %v2496
    %2595 = vmatprep.subr.bf16.mxu0 0
    %2596 = vmatpush1.bf16.msra.mxu0 %v2497
    %2597 = vmatprep.subr.bf16.mxu0 0
    %2598 = vmatpush1.bf16.msra.mxu0 %v2498
    %2599 = vmatprep.subr.bf16.mxu0 0
    %2600 = vmatpush1.bf16.msra.mxu0 %v2499
    %2601 = vmatprep.subr.bf16.mxu0 0
    %2602 = vmatpush1.bf16.msra.mxu0 %v2500
    %2603 = vmatprep.subr.bf16.mxu0 0
    %2604 = vmatpush1.bf16.msra.mxu0 %v2501
    %2605 = vmatprep.subr.bf16.mxu0 0
    %2606 = vmatpush1.bf16.msra.mxu0 %v2502
    %2607 = vmatprep.subr.bf16.mxu0 0
    %2608 = vmatpush1.bf16.msra.mxu0 %v2503
    %2609 = vmatprep.mubr.bf16.mxu0 %v2272
    %2610 = vmatmul.mubr.bf16.gmra.mrb[0].mxu0 %v2271
    %v2611 = vpop.f32.mrb[0].mxu0
    %v2612 = vadd.f32 %v2571, %v2611
    %v2613 = vpop.f32.mrb[0].mxu0
    %v2614 = vpop.f32.mrb[0].mxu0
    %v2615 = vadd.f32 %v2574, %v2614
    %v2616 = vpop.f32.mrb[0].mxu0
    %2617 = vdwg.mxu0
    %2618 = vst [vmem:[#allocation11] sm:$0xff] %v2612
    %2619 = vst [vmem:[#allocation11 + $0x8] sm:$0xff] %v2615
    // Predicated region
    $region58: #{tpu_custom_call.1} parent=1 // pred_check
      _
    $region59: #{tpu_custom_call.1} parent=1 // pred_check_branch
      %2621 = sbr.rel (0) target = $region61
    $region60: #{tpu_custom_call.1} parent=1 // pred_region
      %s2623 = ssub.s32 256, 256
      %2624 = vsyncadd [#allocation4], %s2623
      %s2625 = sshll.u32 [#allocation11], 4
      %s2626 = int_to_ptr.vmem [resolvable:$true] %s2625
      %2631 = dma.vmem_to_hbm [thread:$0]  %s2626, 256, %s9, [#allocation4], 128, 128, 8
    $region61: #{tpu_custom_call.1} parent=1 // pred_fallthru
      _
    // Predicated region
    $region62: #{tpu_custom_call.1} parent=1 // pred_check
      _
    $region63: #{tpu_custom_call.1} parent=1 // pred_check_branch
      %2633 = sbr.rel (0) target = $region65
    $region64: #{tpu_custom_call.1} parent=1 // pred_region
      %2634 = dma.done [#allocation4], 256
    $region65: #{tpu_custom_call.1} parent=1 // pred_fallthru
      _
    %2635 = vsyncpa [#allocation3], 1
    %2636 = vsyncpa [#allocation6], 1
    %2637 = vsyncpa [#allocation9], 1
    %2638 = vsyncpa [#allocation4], 1

</llo_original>
